<compile_context>
chip_gen: v6e
topology: v6e:2x2x1
jax: 0.10.0
libtpu: 0.0.40
codegen_flags: <defaults>
</compile_context>

<pallas_src>
import jax
import jax.numpy as jnp
import numpy as np
from jax.experimental import pallas as pl
from jax.experimental.pallas import tpu as pltpu

_EPS = 1e-5  # PyTorch BatchNorm1d default eps


# ----------------------------- in-kernel helpers -----------------------------

def _bn_train(o, gamma, beta):
    """Training-mode BatchNorm1d: biased batch stats over (batch, time), f32."""
    mu = jnp.mean(jnp.mean(o, axis=1, keepdims=True), axis=0, keepdims=True)
    d = o - mu
    var = jnp.mean(jnp.mean(d * d, axis=1, keepdims=True), axis=0, keepdims=True)
    return d * jax.lax.rsqrt(var + _EPS) * gamma + beta


# --------------------------------- kernel ------------------------------------

def _kernel(x_ref, xpad_ref,                     # x (B,T,C) f32; x padded by 3 each side
            wh_ref,                              # fused [conv2 | conv3] 1x1 heads (C, 2C) bf16
            wbig_ref,                            # fused 4-branch block weight (16C, 4C) bf16
            wfc1_ref, wfc2_ref,                  # SE MLP (bias-free), f32
            w14_ref,                             # conv1_4 (4C, C//2) f32
            wB_ref,                              # tail conv (3*C//2, C) f32
            pv_ref,                              # packed biases / BN affine (8, 4C) f32
            o_ref,                               # (B, T, C) f32 output
            col_ref,                             # (B, T, 16C) f32 im2col scratch
            col2_ref):                           # (B, T, 3*C//2) f32 im2col scratch
    f32, bf16 = jnp.float32, jnp.bfloat16
    x = x_ref[...]                               # (B, T, C) f32
    B, T, C = x.shape
    Ch = w14_ref.shape[1]                        # C // 2

    # ---- unpack the packed per-channel parameter slab (single load) ----------
    pv = pv_ref[...]                             # (8, 4C) f32
    bh    = pv[0:1, 0:2 * C].reshape(1, 1, 2 * C)    # [conv2 | conv3] biases
    b_big = pv[1:2, :].reshape(1, 1, 4 * C)          # fused branch biases
    b14   = pv[2:3, 0:Ch].reshape(1, 1, Ch)
    g1    = pv[3:4, 0:Ch].reshape(1, 1, Ch)
    be1   = pv[4:5, 0:Ch].reshape(1, 1, Ch)
    bB    = pv[5:6, 0:C].reshape(1, 1, C)
    g2    = pv[6:7, 0:C].reshape(1, 1, C)
    be2   = pv[7:8, 0:C].reshape(1, 1, C)

    # ---- fused 1x1 heads: [conv2 | conv3] in one bf16 MXU matmul -------------
    th = jnp.dot(x.astype(bf16).reshape(B * T, C), wh_ref[...],
                 preferred_element_type=f32).reshape(B, T, 2 * C) + bh
    th = jnp.maximum(th, 0.0)
    t1 = th[:, :, 0:C]                           # relu(conv2(x)) body rows
    t2 = th[:, :, C:2 * C]                       # relu(conv3(x)) body rows
    eh = jnp.maximum(bh, 0.0)                    # value of the pad=1 edge rows
    e1 = jnp.broadcast_to(eh[:, :, 0:C], (B, 1, C))
    e2 = jnp.broadcast_to(eh[:, :, C:2 * C], (B, 1, C))
    z1 = jnp.zeros((B, 1, C), f32)
    z3 = jnp.zeros((B, 3, C), f32)

    # ---- assemble the fused im2col columns (slice-stores, no concatenate) ----
    # lane layout: [conv1_3 taps 0..2 | conv1_5 taps 0..4 | conv1_1 taps 0..6 |
    #               conv1(maxpool) tap], each tap C channels wide.
    # branch 1: conv1_3 (k=3, d=1, pad=0) on [e1, t1, e1]  (length T+2)
    col_ref[:, 0:1, 0:C] = e1
    col_ref[:, 1:T, 0:C] = t1[:, 0:T - 1, :]
    col_ref[:, :, C:2 * C] = t1
    col_ref[:, 0:T - 1, 2 * C:3 * C] = t1[:, 1:T, :]
    col_ref[:, T - 1:T, 2 * C:3 * C] = e1
    # branch 2: conv1_5 (k=5, d=2, pad=3) on [0,0,0, e2, t2, e2, 0,0,0]
    col_ref[:, 0:3, 3 * C:4 * C] = z3
    col_ref[:, 3:4, 3 * C:4 * C] = e2
    col_ref[:, 4:T, 3 * C:4 * C] = t2[:, 0:T - 4, :]
    col_ref[:, 0:1, 4 * C:5 * C] = z1
    col_ref[:, 1:2, 4 * C:5 * C] = e2
    col_ref[:, 2:T, 4 * C:5 * C] = t2[:, 0:T - 2, :]
    col_ref[:, :, 5 * C:6 * C] = t2
    col_ref[:, 0:T - 2, 6 * C:7 * C] = t2[:, 2:T, :]
    col_ref[:, T - 2:T - 1, 6 * C:7 * C] = e2
    col_ref[:, T - 1:T, 6 * C:7 * C] = z1
    col_ref[:, 0:T - 4, 7 * C:8 * C] = t2[:, 4:T, :]
    col_ref[:, T - 4:T - 3, 7 * C:8 * C] = e2
    col_ref[:, T - 3:T, 7 * C:8 * C] = z3
    # branch 3: conv1_1 (k=7, pad=3) on the wrapper-padded x
    for k in range(7):
        col_ref[:, :, (8 + k) * C:(9 + k) * C] = xpad_ref[:, k:k + T, :]
    # branch 4: maxpool(k=3, s=1) in f32, then 1x1 conv with pad=1 edge rows
    xm = jnp.maximum(jnp.maximum(x[:, 0:T - 2, :], x[:, 1:T - 1, :]), x[:, 2:T, :])
    col_ref[:, 0:1, 15 * C:16 * C] = z1
    col_ref[:, 1:T - 1, 15 * C:16 * C] = xm
    col_ref[:, T - 1:T, 15 * C:16 * C] = z1

    # ---- one deep, 4C-wide MXU matmul produces the whole branch slab ---------
    col = col_ref[...].astype(bf16).reshape(B * T, 16 * C)
    xc = jnp.dot(col, wbig_ref[...], preferred_element_type=f32)
    xc = jnp.maximum(xc.reshape(B, T, 4 * C) + b_big, 0.0)       # (B, T, 4C) f32

    # ---- squeeze-excite attention (f32; transcendentals on the EUP slot) -----
    y = jnp.mean(xc, axis=1)                                     # (B, 4C)
    h = jnp.maximum(jnp.dot(y, wfc1_ref[...], preferred_element_type=f32), 0.0)
    zg = jnp.dot(h, wfc2_ref[...], preferred_element_type=f32)   # (B, 4C)
    gate = pl.reciprocal(1.0 + jnp.exp(-zg), approx=True)        # sigmoid
    xatt = xc * gate[:, None, :]                                 # (B, T, 4C) f32

    # ---- conv1_4 (1x1, 4C -> C//2, f32), BN1, relu ----------------------------
    out1 = jnp.dot(xatt.reshape(B * T, 4 * C), w14_ref[...],
                   preferred_element_type=f32).reshape(B, T, Ch) + b14
    out1 = jnp.maximum(_bn_train(out1, g1, be1), 0.0)

    # ---- tail conv (k=3, d=2, pad=2, f32) via its own small im2col scratch ----
    zh = jnp.zeros((B, 2, Ch), f32)
    col2_ref[:, 0:2, 0:Ch] = zh
    col2_ref[:, 2:T, 0:Ch] = out1[:, 0:T - 2, :]
    col2_ref[:, :, Ch:2 * Ch] = out1
    col2_ref[:, 0:T - 2, 2 * Ch:3 * Ch] = out1[:, 2:T, :]
    col2_ref[:, T - 2:T, 2 * Ch:3 * Ch] = zh
    out2 = jnp.dot(col2_ref[...].reshape(B * T, 3 * Ch), wB_ref[...],
                   preferred_element_type=f32).reshape(B, T, C) + bB
    out2 = _bn_train(out2, g2, be2)

    # ---- residual add, store --------------------------------------------------
    o_ref[...] = (out2 + x).astype(o_ref.dtype)


# ------------------------------ glue / wrapper --------------------------------

def _flat_w(w):
    """PyTorch conv weight (Cout, Cin, K) -> im2col weight (K*Cin, Cout), f32."""
    Cout, Cin, K = w.shape
    return jnp.transpose(w, (2, 1, 0)).reshape(K * Cin, Cout).astype(jnp.float32)


def init_params(key, C):
    """Deterministic synthetic parameters matching the PyTorch module shapes."""
    H = (4 * C) // 64
    assert H >= 1, "in_channels must be >= 16 (fc hidden = 4*C // 64)"
    ks = jax.random.split(key, 16)

    def w(k, shape, scale=0.1):
        return (scale * jax.random.normal(k, shape)).astype(jnp.float32)

    p = {}
    p["conv2_w"] = w(ks[0], (C, C, 1));   p["conv2_b"] = w(ks[1], (C,))
    p["conv3_w"] = w(ks[2], (C, C, 1));   p["conv3_b"] = w(ks[3], (C,))
    p["conv1_w"] = w(ks[4], (C, C, 1));   p["conv1_b"] = w(ks[5], (C,))
    p["conv13_w"] = w(ks[6], (C, C, 3));  p["conv13_b"] = w(ks[7], (C,))
    p["conv15_w"] = w(ks[8], (C, C, 5));  p["conv15_b"] = w(ks[9], (C,))
    p["conv11_w"] = w(ks[10], (C, C, 7)); p["conv11_b"] = w(ks[11], (C,))
    p["fc1_w"] = w(ks[12], (H, 4 * C))                      # Linear, bias=False
    p["fc2_w"] = w(ks[13], (4 * C, H))                      # Linear, bias=False
    p["conv14_w"] = w(ks[14], (C // 2, 4 * C, 1)); p["conv14_b"] = w(ks[15], (C // 2,))
    p["bn1_g"] = jnp.ones((C // 2,), jnp.float32); p["bn1_b"] = jnp.zeros((C // 2,), jnp.float32)
    k2a, k2b = jax.random.split(jax.random.fold_in(key, 999))
    p["convB_w"] = w(k2a, (C, C // 2, 3)); p["convB_b"] = w(k2b, (C,))
    p["bn2_g"] = jnp.ones((C,), jnp.float32); p["bn2_b"] = jnp.zeros((C,), jnp.float32)
    return p


def _kernel_args(x_btc, p):
    C = x_btc.shape[-1]
    bf16 = jnp.bfloat16

    # fused 1x1 heads: [conv2 | conv3]
    wh = jnp.concatenate([_flat_w(p["conv2_w"]), _flat_w(p["conv3_w"])],
                         axis=1).astype(bf16)                         # (C, 2C)

    # fused 4-branch block weight: (16C, 4C) with zero off-blocks
    wbig = jnp.zeros((16 * C, 4 * C), jnp.float32)
    wbig = wbig.at[0:3 * C, 0:C].set(_flat_w(p["conv13_w"]))
    wbig = wbig.at[3 * C:8 * C, C:2 * C].set(_flat_w(p["conv15_w"]))
    wbig = wbig.at[8 * C:15 * C, 2 * C:3 * C].set(_flat_w(p["conv11_w"]))
    wbig = wbig.at[15 * C:16 * C, 3 * C:4 * C].set(_flat_w(p["conv1_w"]))
    wbig = wbig.astype(bf16)

    # packed per-channel params: one (8, 4C) f32 slab (one DMA instead of ~14)
    def row(v):
        v = v.astype(jnp.float32)
        return jnp.pad(v, (0, 4 * C - v.shape[0]))
    pv = jnp.stack([
        row(jnp.concatenate([p["conv2_b"], p["conv3_b"]])),
        row(jnp.concatenate([p["conv13_b"], p["conv15_b"], p["conv11_b"], p["conv1_b"]])),
        row(p["conv14_b"]), row(p["bn1_g"]), row(p["bn1_b"]),
        row(p["convB_b"]), row(p["bn2_g"]), row(p["bn2_b"]),
    ])

    # x pre-padded by 3 on each side of the time axis (conv1_1 / maxpool taps)
    xpad = jnp.pad(x_btc, ((0, 0), (3, 3), (0, 0)))

    return [
        x_btc, xpad, wh, wbig,
        jnp.transpose(p["fc1_w"]).astype(jnp.float32),   # (4C, H)
        jnp.transpose(p["fc2_w"]).astype(jnp.float32),   # (H, 4C)
        _flat_w(p["conv14_w"]),                          # (4C, C//2) f32
        _flat_w(p["convB_w"]),                           # (3*C//2, C) f32
        pv,
    ]


def _vmem_cap_bytes():
    try:
        return int(pltpu.get_tpu_info().vmem_capacity_bytes)
    except Exception:
        return 64 << 20   # conservative (v7x physical VMEM)


@jax.jit
def improved_res2dilated_conv1d(x_nct, params):
    """x_nct: (B, C, T) float32 (PyTorch NCT layout). Returns (B, C, T)."""
    B, C, T = x_nct.shape
    assert T >= 8 and T % 8 == 0, "toy kernel assumes T is sublane-tile aligned"
    assert C >= 16 and C % 8 == 0
    Ch = C // 2
    # NCT -> NTC so channels map to TPU lanes and every conv is an MXU matmul.
    x_btc = jnp.transpose(x_nct, (0, 2, 1)).astype(jnp.float32)
    args = _kernel_args(x_btc, params)

    scratch_shapes = [
        pltpu.VMEM((B, T, 16 * C), jnp.float32),     # fused 4-branch im2col columns
        pltpu.VMEM((B, T, 3 * Ch), jnp.float32),     # tail-conv im2col columns
    ]
    # working-set estimate + per-generation VMEM cap (128 MiB v5e/v6e, 64 MiB v7x)
    arg_bytes = sum(int(np.prod(a.shape)) * jnp.dtype(a.dtype).itemsize for a in args)
    scratch_bytes = (B * T * 16 * C + B * T * 3 * Ch) * 4
    out_bytes = B * T * C * 4
    cap = _vmem_cap_bytes()
    vmem_limit = int(min(cap - (16 << 20),
                         max(32 << 20, 4 * (arg_bytes + out_bytes + scratch_bytes))))

    out_btc = pl.pallas_call(
        _kernel,
        out_shape=jax.ShapeDtypeStruct((B, T, C), jnp.float32),
        in_specs=[pl.BlockSpec(memory_space=pltpu.MemorySpace.VMEM)] * len(args),
        out_specs=pl.BlockSpec(memory_space=pltpu.MemorySpace.VMEM),
        scratch_shapes=scratch_shapes,
        compiler_params=pltpu.CompilerParams(vmem_limit_bytes=vmem_limit),
    )(*args)
    return jnp.transpose(out_btc, (0, 2, 1))


# ------------------------- plain-JAX reference (check) ------------------------

def _conv1d_ref(x, w, b, pad, dil):
    out = jax.lax.conv_general_dilated(
        x, w, window_strides=(1,), padding=[(pad, pad)], rhs_dilation=(dil,),
        dimension_numbers=("NCH", "OIH", "NCH"),
        precision=jax.lax.Precision.HIGHEST)
    return out + b[None, :, None]


def _bn_ref(o, g, b):
    mu = jnp.mean(o, axis=(0, 2), keepdims=True)
    var = jnp.mean((o - mu) ** 2, axis=(0, 2), keepdims=True)
    return (o - mu) * jax.lax.rsqrt(var + _EPS) * g[None, :, None] + b[None, :, None]


def reference_forward(x, p):
    relu = jax.nn.relu
    x1 = relu(_conv1d_ref(relu(_conv1d_ref(x, p["conv2_w"], p["conv2_b"], 1, 1)),
                          p["conv13_w"], p["conv13_b"], 0, 1))
    x2 = relu(_conv1d_ref(relu(_conv1d_ref(x, p["conv3_w"], p["conv3_b"], 1, 1)),
                          p["conv15_w"], p["conv15_b"], 3, 2))
    x3 = relu(_conv1d_ref(x, p["conv11_w"], p["conv11_b"], 3, 1))
    xm = jnp.maximum(jnp.maximum(x[:, :, :-2], x[:, :, 1:-1]), x[:, :, 2:])
    x4 = relu(_conv1d_ref(xm, p["conv1_w"], p["conv1_b"], 1, 1))
    xc = jnp.concatenate([x1, x2, x3, x4], axis=1)
    y = jnp.mean(xc, axis=2)
    h = relu(y @ p["fc1_w"].T)
    y2 = h @ p["fc2_w"].T
    x_att = xc * jax.nn.sigmoid(y2)[:, :, None]
    out1 = _conv1d_ref(x_att, p["conv14_w"], p["conv14_b"], 0, 1)
    out1 = relu(_bn_ref(out1, p["bn1_g"], p["bn1_b"]))
    out2 = _conv1d_ref(out1, p["convB_w"], p["convB_b"], 2, 2)
    out2 = _bn_ref(out2, p["bn2_g"], p["bn2_b"])
    return out2 + x


# ----------------------------------- main -------------------------------------

if __name__ == "__main__":
    B, C, T = 2, 32, 16          # in_channels=32 -> fc hidden = 4*32 // 64 = 2
    key = jax.random.PRNGKey(0)
    kx, kp = jax.random.split(key)
    x = jax.random.normal(kx, (B, C, T), dtype=jnp.float32)
    params = init_params(kp, C)

    out = improved_res2dilated_conv1d(x, params)
    out = jax.block_until_ready(out)
    assert out.shape == (B, C, T)

    ref = reference_forward(x, params)
    # bf16 MXU operands in the branch convs feed two training-mode BatchNorms,
    # so allow a few percent absolute slack vs the all-f32 reference.
    np.testing.assert_allclose(np.asarray(out), np.asarray(ref), rtol=5e-2, atol=1e-1)

    print("KERNEL_OK")
</pallas_src>

<mosaic_0001>
module attributes {stable_mosaic.version = 11 : i64} {
  func.func @_kernel(%arg0: memref<2x16x32xf32, #tpu.memory_space<vmem>>, %arg1: memref<2x22x32xf32, #tpu.memory_space<vmem>>, %arg2: memref<32x64xbf16, #tpu.memory_space<vmem>>, %arg3: memref<512x128xbf16, #tpu.memory_space<vmem>>, %arg4: memref<128x2xf32, #tpu.memory_space<vmem>>, %arg5: memref<2x128xf32, #tpu.memory_space<vmem>>, %arg6: memref<128x16xf32, #tpu.memory_space<vmem>>, %arg7: memref<48x32xf32, #tpu.memory_space<vmem>>, %arg8: memref<8x128xf32, #tpu.memory_space<vmem>>, %arg9: memref<2x16x32xf32, #tpu.memory_space<vmem>>, %arg10: memref<2x16x512xf32, #tpu.memory_space<vmem>>, %arg11: memref<2x16x48xf32, #tpu.memory_space<vmem>>) attributes {dimension_semantics = [], scalar_prefetch = 0 : i64, scratch_operands = 2 : i64, tpu.core_type = #tpu.core_type<tc>} {
    %c0 = arith.constant 0 : index
    %c0_0 = arith.constant 0 : index
    %c0_1 = arith.constant 0 : index
    %0 = vector.load %arg0[%c0, %c0_0, %c0_1] : memref<2x16x32xf32, #tpu.memory_space<vmem>>, vector<2x16x32xf32>
    %c0_2 = arith.constant 0 : index
    %c0_3 = arith.constant 0 : index
    %1 = vector.load %arg8[%c0_2, %c0_3] : memref<8x128xf32, #tpu.memory_space<vmem>>, vector<8x128xf32>
    %2 = vector.extract_strided_slice %1 {offsets = [0, 0], sizes = [1, 64], strides = [1, 1]} : vector<8x128xf32> to vector<1x64xf32>
    %3 = vector.shape_cast %2 : vector<1x64xf32> to vector<1x1x64xf32>
    %4 = vector.extract_strided_slice %1 {offsets = [1, 0], sizes = [1, 128], strides = [1, 1]} : vector<8x128xf32> to vector<1x128xf32>
    %5 = vector.shape_cast %4 : vector<1x128xf32> to vector<1x1x128xf32>
    %6 = vector.extract_strided_slice %1 {offsets = [2, 0], sizes = [1, 16], strides = [1, 1]} : vector<8x128xf32> to vector<1x16xf32>
    %7 = vector.shape_cast %6 : vector<1x16xf32> to vector<1x1x16xf32>
    %8 = vector.extract_strided_slice %1 {offsets = [3, 0], sizes = [1, 16], strides = [1, 1]} : vector<8x128xf32> to vector<1x16xf32>
    %9 = vector.shape_cast %8 : vector<1x16xf32> to vector<1x1x16xf32>
    %10 = vector.extract_strided_slice %1 {offsets = [4, 0], sizes = [1, 16], strides = [1, 1]} : vector<8x128xf32> to vector<1x16xf32>
    %11 = vector.shape_cast %10 : vector<1x16xf32> to vector<1x1x16xf32>
    %12 = vector.extract_strided_slice %1 {offsets = [5, 0], sizes = [1, 32], strides = [1, 1]} : vector<8x128xf32> to vector<1x32xf32>
    %13 = vector.shape_cast %12 : vector<1x32xf32> to vector<1x1x32xf32>
    %14 = vector.extract_strided_slice %1 {offsets = [6, 0], sizes = [1, 32], strides = [1, 1]} : vector<8x128xf32> to vector<1x32xf32>
    %15 = vector.shape_cast %14 : vector<1x32xf32> to vector<1x1x32xf32>
    %16 = vector.extract_strided_slice %1 {offsets = [7, 0], sizes = [1, 32], strides = [1, 1]} : vector<8x128xf32> to vector<1x32xf32>
    %17 = vector.shape_cast %16 : vector<1x32xf32> to vector<1x1x32xf32>
    %18 = arith.truncf %0 : vector<2x16x32xf32> to vector<2x16x32xbf16>
    %19 = vector.shape_cast %18 : vector<2x16x32xbf16> to vector<32x32xbf16>
    %c0_4 = arith.constant 0 : index
    %c0_5 = arith.constant 0 : index
    %20 = vector.load %arg2[%c0_4, %c0_5] : memref<32x64xbf16, #tpu.memory_space<vmem>>, vector<32x64xbf16>
    %cst = arith.constant dense<0.000000e+00> : vector<32x64xf32>
    %21 = tpu.matmul %19, %20, %cst {dimension_numbers = #tpu.dot_dimension_numbers<[1], [0], [0], [1], [0, 0, 1, 1], [], []>} : vector<32x32xbf16>, vector<32x64xbf16>, vector<32x64xf32> -> vector<32x64xf32>
    %22 = vector.shape_cast %21 : vector<32x64xf32> to vector<2x16x64xf32>
    %23 = vector.broadcast %3 : vector<1x1x64xf32> to vector<2x16x64xf32>
    %24 = arith.addf %22, %23 : vector<2x16x64xf32>
    %cst_6 = arith.constant 0.000000e+00 : f32
    %25 = vector.broadcast %cst_6 : f32 to vector<2x16x64xf32>
    %26 = arith.maximumf %24, %25 : vector<2x16x64xf32>
    %27 = vector.extract_strided_slice %26 {offsets = [0, 0, 0], sizes = [2, 16, 32], strides = [1, 1, 1]} : vector<2x16x64xf32> to vector<2x16x32xf32>
    %28 = vector.extract_strided_slice %26 {offsets = [0, 0, 32], sizes = [2, 16, 32], strides = [1, 1, 1]} : vector<2x16x64xf32> to vector<2x16x32xf32>
    %cst_7 = arith.constant 0.000000e+00 : f32
    %29 = vector.broadcast %cst_7 : f32 to vector<1x1x64xf32>
    %30 = arith.maximumf %3, %29 : vector<1x1x64xf32>
    %31 = vector.extract_strided_slice %30 {offsets = [0, 0, 0], sizes = [1, 1, 32], strides = [1, 1, 1]} : vector<1x1x64xf32> to vector<1x1x32xf32>
    %32 = vector.shape_cast %31 : vector<1x1x32xf32> to vector<1x1x32xf32>
    %33 = vector.broadcast %32 : vector<1x1x32xf32> to vector<2x1x32xf32>
    %34 = vector.extract_strided_slice %30 {offsets = [0, 0, 32], sizes = [1, 1, 32], strides = [1, 1, 1]} : vector<1x1x64xf32> to vector<1x1x32xf32>
    %35 = vector.shape_cast %34 : vector<1x1x32xf32> to vector<1x1x32xf32>
    %36 = vector.broadcast %35 : vector<1x1x32xf32> to vector<2x1x32xf32>
    %cst_8 = arith.constant 0.000000e+00 : f32
    %37 = vector.broadcast %cst_8 : f32 to vector<2x1x32xf32>
    %cst_9 = arith.constant 0.000000e+00 : f32
    %38 = vector.broadcast %cst_9 : f32 to vector<2x3x32xf32>
    %c0_10 = arith.constant 0 : index
    %c0_11 = arith.constant 0 : index
    %c0_12 = arith.constant 0 : index
    %39 = vector.load %arg10[%c0_10, %c0_11, %c0_12] : memref<2x16x512xf32, #tpu.memory_space<vmem>>, vector<2x1x32xf32>
    tpu.vector_store %arg10[%c0_10, %c0_11, %c0_12], %33 {strides = array<i32>} : memref<2x16x512xf32, #tpu.memory_space<vmem>>, vector<2x1x32xf32>,
    %40 = vector.extract_strided_slice %27 {offsets = [0, 0, 0], sizes = [2, 15, 32], strides = [1, 1, 1]} : vector<2x16x32xf32> to vector<2x15x32xf32>
    %c0_13 = arith.constant 0 : index
    %c1 = arith.constant 1 : index
    %c0_14 = arith.constant 0 : index
    %41 = vector.load %arg10[%c0_13, %c1, %c0_14] : memref<2x16x512xf32, #tpu.memory_space<vmem>>, vector<2x15x32xf32>
    tpu.vector_store %arg10[%c0_13, %c1, %c0_14], %40 {strides = array<i32>} : memref<2x16x512xf32, #tpu.memory_space<vmem>>, vector<2x15x32xf32>,
    %c0_15 = arith.constant 0 : index
    %c0_16 = arith.constant 0 : index
    %c32 = arith.constant 32 : index
    %42 = vector.load %arg10[%c0_15, %c0_16, %c32] : memref<2x16x512xf32, #tpu.memory_space<vmem>>, vector<2x16x32xf32>
    tpu.vector_store %arg10[%c0_15, %c0_16, %c32], %27 {strides = array<i32>} : memref<2x16x512xf32, #tpu.memory_space<vmem>>, vector<2x16x32xf32>,
    %43 = vector.extract_strided_slice %27 {offsets = [0, 1, 0], sizes = [2, 15, 32], strides = [1, 1, 1]} : vector<2x16x32xf32> to vector<2x15x32xf32>
    %c0_17 = arith.constant 0 : index
    %c0_18 = arith.constant 0 : index
    %c64 = arith.constant 64 : index
    %44 = vector.load %arg10[%c0_17, %c0_18, %c64] : memref<2x16x512xf32, #tpu.memory_space<vmem>>, vector<2x15x32xf32>
    tpu.vector_store %arg10[%c0_17, %c0_18, %c64], %43 {strides = array<i32>} : memref<2x16x512xf32, #tpu.memory_space<vmem>>, vector<2x15x32xf32>,
    %c0_19 = arith.constant 0 : index
    %c15 = arith.constant 15 : index
    %c64_20 = arith.constant 64 : index
    %45 = vector.load %arg10[%c0_19, %c15, %c64_20] : memref<2x16x512xf32, #tpu.memory_space<vmem>>, vector<2x1x32xf32>
    tpu.vector_store %arg10[%c0_19, %c15, %c64_20], %33 {strides = array<i32>} : memref<2x16x512xf32, #tpu.memory_space<vmem>>, vector<2x1x32xf32>,
    %c0_21 = arith.constant 0 : index
    %c0_22 = arith.constant 0 : index
    %c96 = arith.constant 96 : index
    %46 = vector.load %arg10[%c0_21, %c0_22, %c96] : memref<2x16x512xf32, #tpu.memory_space<vmem>>, vector<2x3x32xf32>
    tpu.vector_store %arg10[%c0_21, %c0_22, %c96], %38 {strides = array<i32>} : memref<2x16x512xf32, #tpu.memory_space<vmem>>, vector<2x3x32xf32>,
    %c0_23 = arith.constant 0 : index
    %c3 = arith.constant 3 : index
    %c96_24 = arith.constant 96 : index
    %47 = vector.load %arg10[%c0_23, %c3, %c96_24] : memref<2x16x512xf32, #tpu.memory_space<vmem>>, vector<2x1x32xf32>
    tpu.vector_store %arg10[%c0_23, %c3, %c96_24], %36 {strides = array<i32>} : memref<2x16x512xf32, #tpu.memory_space<vmem>>, vector<2x1x32xf32>,
    %48 = vector.extract_strided_slice %28 {offsets = [0, 0, 0], sizes = [2, 12, 32], strides = [1, 1, 1]} : vector<2x16x32xf32> to vector<2x12x32xf32>
    %c0_25 = arith.constant 0 : index
    %c4 = arith.constant 4 : index
    %c96_26 = arith.constant 96 : index
    %49 = vector.load %arg10[%c0_25, %c4, %c96_26] : memref<2x16x512xf32, #tpu.memory_space<vmem>>, vector<2x12x32xf32>
    tpu.vector_store %arg10[%c0_25, %c4, %c96_26], %48 {strides = array<i32>} : memref<2x16x512xf32, #tpu.memory_space<vmem>>, vector<2x12x32xf32>,
    %c0_27 = arith.constant 0 : index
    %c0_28 = arith.constant 0 : index
    %c128 = arith.constant 128 : index
    %50 = vector.load %arg10[%c0_27, %c0_28, %c128] : memref<2x16x512xf32, #tpu.memory_space<vmem>>, vector<2x1x32xf32>
    tpu.vector_store %arg10[%c0_27, %c0_28, %c128], %37 {strides = array<i32>} : memref<2x16x512xf32, #tpu.memory_space<vmem>>, vector<2x1x32xf32>,
    %c0_29 = arith.constant 0 : index
    %c1_30 = arith.constant 1 : index
    %c128_31 = arith.constant 128 : index
    %51 = vector.load %arg10[%c0_29, %c1_30, %c128_31] : memref<2x16x512xf32, #tpu.memory_space<vmem>>, vector<2x1x32xf32>
    tpu.vector_store %arg10[%c0_29, %c1_30, %c128_31], %36 {strides = array<i32>} : memref<2x16x512xf32, #tpu.memory_space<vmem>>, vector<2x1x32xf32>,
    %52 = vector.extract_strided_slice %28 {offsets = [0, 0, 0], sizes = [2, 14, 32], strides = [1, 1, 1]} : vector<2x16x32xf32> to vector<2x14x32xf32>
    %c0_32 = arith.constant 0 : index
    %c2 = arith.constant 2 : index
    %c128_33 = arith.constant 128 : index
    %53 = vector.load %arg10[%c0_32, %c2, %c128_33] : memref<2x16x512xf32, #tpu.memory_space<vmem>>, vector<2x14x32xf32>
    tpu.vector_store %arg10[%c0_32, %c2, %c128_33], %52 {strides = array<i32>} : memref<2x16x512xf32, #tpu.memory_space<vmem>>, vector<2x14x32xf32>,
    %c0_34 = arith.constant 0 : index
    %c0_35 = arith.constant 0 : index
    %c160 = arith.constant 160 : index
    %54 = vector.load %arg10[%c0_34, %c0_35, %c160] : memref<2x16x512xf32, #tpu.memory_space<vmem>>, vector<2x16x32xf32>
    tpu.vector_store %arg10[%c0_34, %c0_35, %c160], %28 {strides = array<i32>} : memref<2x16x512xf32, #tpu.memory_space<vmem>>, vector<2x16x32xf32>,
    %55 = vector.extract_strided_slice %28 {offsets = [0, 2, 0], sizes = [2, 14, 32], strides = [1, 1, 1]} : vector<2x16x32xf32> to vector<2x14x32xf32>
    %c0_36 = arith.constant 0 : index
    %c0_37 = arith.constant 0 : index
    %c192 = arith.constant 192 : index
    %56 = vector.load %arg10[%c0_36, %c0_37, %c192] : memref<2x16x512xf32, #tpu.memory_space<vmem>>, vector<2x14x32xf32>
    tpu.vector_store %arg10[%c0_36, %c0_37, %c192], %55 {strides = array<i32>} : memref<2x16x512xf32, #tpu.memory_space<vmem>>, vector<2x14x32xf32>,
    %c0_38 = arith.constant 0 : index
    %c14 = arith.constant 14 : index
    %c192_39 = arith.constant 192 : index
    %57 = vector.load %arg10[%c0_38, %c14, %c192_39] : memref<2x16x512xf32, #tpu.memory_space<vmem>>, vector<2x1x32xf32>
    tpu.vector_store %arg10[%c0_38, %c14, %c192_39], %36 {strides = array<i32>} : memref<2x16x512xf32, #tpu.memory_space<vmem>>, vector<2x1x32xf32>,
    %c0_40 = arith.constant 0 : index
    %c15_41 = arith.constant 15 : index
    %c192_42 = arith.constant 192 : index
    %58 = vector.load %arg10[%c0_40, %c15_41, %c192_42] : memref<2x16x512xf32, #tpu.memory_space<vmem>>, vector<2x1x32xf32>
    tpu.vector_store %arg10[%c0_40, %c15_41, %c192_42], %37 {strides = array<i32>} : memref<2x16x512xf32, #tpu.memory_space<vmem>>, vector<2x1x32xf32>,
    %59 = vector.extract_strided_slice %28 {offsets = [0, 4, 0], sizes = [2, 12, 32], strides = [1, 1, 1]} : vector<2x16x32xf32> to vector<2x12x32xf32>
    %c0_43 = arith.constant 0 : index
    %c0_44 = arith.constant 0 : index
    %c224 = arith.constant 224 : index
    %60 = vector.load %arg10[%c0_43, %c0_44, %c224] : memref<2x16x512xf32, #tpu.memory_space<vmem>>, vector<2x12x32xf32>
    tpu.vector_store %arg10[%c0_43, %c0_44, %c224], %59 {strides = array<i32>} : memref<2x16x512xf32, #tpu.memory_space<vmem>>, vector<2x12x32xf32>,
    %c0_45 = arith.constant 0 : index
    %c12 = arith.constant 12 : index
    %c224_46 = arith.constant 224 : index
    %61 = vector.load %arg10[%c0_45, %c12, %c224_46] : memref<2x16x512xf32, #tpu.memory_space<vmem>>, vector<2x1x32xf32>
    tpu.vector_store %arg10[%c0_45, %c12, %c224_46], %36 {strides = array<i32>} : memref<2x16x512xf32, #tpu.memory_space<vmem>>, vector<2x1x32xf32>,
    %c0_47 = arith.constant 0 : index
    %c13 = arith.constant 13 : index
    %c224_48 = arith.constant 224 : index
    %62 = vector.load %arg10[%c0_47, %c13, %c224_48] : memref<2x16x512xf32, #tpu.memory_space<vmem>>, vector<2x3x32xf32>
    tpu.vector_store %arg10[%c0_47, %c13, %c224_48], %38 {strides = array<i32>} : memref<2x16x512xf32, #tpu.memory_space<vmem>>, vector<2x3x32xf32>,
    %c0_49 = arith.constant 0 : index
    %c0_50 = arith.constant 0 : index
    %c0_51 = arith.constant 0 : index
    %63 = vector.load %arg1[%c0_49, %c0_50, %c0_51] : memref<2x22x32xf32, #tpu.memory_space<vmem>>, vector<2x16x32xf32>
    %c0_52 = arith.constant 0 : index
    %c0_53 = arith.constant 0 : index
    %c256 = arith.constant 256 : index
    %64 = vector.load %arg10[%c0_52, %c0_53, %c256] : memref<2x16x512xf32, #tpu.memory_space<vmem>>, vector<2x16x32xf32>
    tpu.vector_store %arg10[%c0_52, %c0_53, %c256], %63 {strides = array<i32>} : memref<2x16x512xf32, #tpu.memory_space<vmem>>, vector<2x16x32xf32>,
    %c0_54 = arith.constant 0 : index
    %c1_55 = arith.constant 1 : index
    %c0_56 = arith.constant 0 : index
    %65 = vector.load %arg1[%c0_54, %c1_55, %c0_56] : memref<2x22x32xf32, #tpu.memory_space<vmem>>, vector<2x16x32xf32>
    %c0_57 = arith.constant 0 : index
    %c0_58 = arith.constant 0 : index
    %c288 = arith.constant 288 : index
    %66 = vector.load %arg10[%c0_57, %c0_58, %c288] : memref<2x16x512xf32, #tpu.memory_space<vmem>>, vector<2x16x32xf32>
    tpu.vector_store %arg10[%c0_57, %c0_58, %c288], %65 {strides = array<i32>} : memref<2x16x512xf32, #tpu.memory_space<vmem>>, vector<2x16x32xf32>,
    %c0_59 = arith.constant 0 : index
    %c2_60 = arith.constant 2 : index
    %c0_61 = arith.constant 0 : index
    %67 = vector.load %arg1[%c0_59, %c2_60, %c0_61] : memref<2x22x32xf32, #tpu.memory_space<vmem>>, vector<2x16x32xf32>
    %c0_62 = arith.constant 0 : index
    %c0_63 = arith.constant 0 : index
    %c320 = arith.constant 320 : index
    %68 = vector.load %arg10[%c0_62, %c0_63, %c320] : memref<2x16x512xf32, #tpu.memory_space<vmem>>, vector<2x16x32xf32>
    tpu.vector_store %arg10[%c0_62, %c0_63, %c320], %67 {strides = array<i32>} : memref<2x16x512xf32, #tpu.memory_space<vmem>>, vector<2x16x32xf32>,
    %c0_64 = arith.constant 0 : index
    %c3_65 = arith.constant 3 : index
    %c0_66 = arith.constant 0 : index
    %69 = vector.load %arg1[%c0_64, %c3_65, %c0_66] : memref<2x22x32xf32, #tpu.memory_space<vmem>>, vector<2x16x32xf32>
    %c0_67 = arith.constant 0 : index
    %c0_68 = arith.constant 0 : index
    %c352 = arith.constant 352 : index
    %70 = vector.load %arg10[%c0_67, %c0_68, %c352] : memref<2x16x512xf32, #tpu.memory_space<vmem>>, vector<2x16x32xf32>
    tpu.vector_store %arg10[%c0_67, %c0_68, %c352], %69 {strides = array<i32>} : memref<2x16x512xf32, #tpu.memory_space<vmem>>, vector<2x16x32xf32>,
    %c0_69 = arith.constant 0 : index
    %c4_70 = arith.constant 4 : index
    %c0_71 = arith.constant 0 : index
    %71 = vector.load %arg1[%c0_69, %c4_70, %c0_71] : memref<2x22x32xf32, #tpu.memory_space<vmem>>, vector<2x16x32xf32>
    %c0_72 = arith.constant 0 : index
    %c0_73 = arith.constant 0 : index
    %c384 = arith.constant 384 : index
    %72 = vector.load %arg10[%c0_72, %c0_73, %c384] : memref<2x16x512xf32, #tpu.memory_space<vmem>>, vector<2x16x32xf32>
    tpu.vector_store %arg10[%c0_72, %c0_73, %c384], %71 {strides = array<i32>} : memref<2x16x512xf32, #tpu.memory_space<vmem>>, vector<2x16x32xf32>,
    %c0_74 = arith.constant 0 : index
    %c5 = arith.constant 5 : index
    %c0_75 = arith.constant 0 : index
    %73 = vector.load %arg1[%c0_74, %c5, %c0_75] : memref<2x22x32xf32, #tpu.memory_space<vmem>>, vector<2x16x32xf32>
    %c0_76 = arith.constant 0 : index
    %c0_77 = arith.constant 0 : index
    %c416 = arith.constant 416 : index
    %74 = vector.load %arg10[%c0_76, %c0_77, %c416] : memref<2x16x512xf32, #tpu.memory_space<vmem>>, vector<2x16x32xf32>
    tpu.vector_store %arg10[%c0_76, %c0_77, %c416], %73 {strides = array<i32>} : memref<2x16x512xf32, #tpu.memory_space<vmem>>, vector<2x16x32xf32>,
    %c0_78 = arith.constant 0 : index
    %c6 = arith.constant 6 : index
    %c0_79 = arith.constant 0 : index
    %75 = vector.load %arg1[%c0_78, %c6, %c0_79] : memref<2x22x32xf32, #tpu.memory_space<vmem>>, vector<2x16x32xf32>
    %c0_80 = arith.constant 0 : index
    %c0_81 = arith.constant 0 : index
    %c448 = arith.constant 448 : index
    %76 = vector.load %arg10[%c0_80, %c0_81, %c448] : memref<2x16x512xf32, #tpu.memory_space<vmem>>, vector<2x16x32xf32>
    tpu.vector_store %arg10[%c0_80, %c0_81, %c448], %75 {strides = array<i32>} : memref<2x16x512xf32, #tpu.memory_space<vmem>>, vector<2x16x32xf32>,
    %77 = vector.extract_strided_slice %0 {offsets = [0, 0, 0], sizes = [2, 14, 32], strides = [1, 1, 1]} : vector<2x16x32xf32> to vector<2x14x32xf32>
    %78 = vector.extract_strided_slice %0 {offsets = [0, 1, 0], sizes = [2, 14, 32], strides = [1, 1, 1]} : vector<2x16x32xf32> to vector<2x14x32xf32>
    %79 = arith.maximumf %77, %78 : vector<2x14x32xf32>
    %80 = vector.extract_strided_slice %0 {offsets = [0, 2, 0], sizes = [2, 14, 32], strides = [1, 1, 1]} : vector<2x16x32xf32> to vector<2x14x32xf32>
    %81 = arith.maximumf %79, %80 : vector<2x14x32xf32>
    %c0_82 = arith.constant 0 : index
    %c0_83 = arith.constant 0 : index
    %c480 = arith.constant 480 : index
    %82 = vector.load %arg10[%c0_82, %c0_83, %c480] : memref<2x16x512xf32, #tpu.memory_space<vmem>>, vector<2x1x32xf32>
    tpu.vector_store %arg10[%c0_82, %c0_83, %c480], %37 {strides = array<i32>} : memref<2x16x512xf32, #tpu.memory_space<vmem>>, vector<2x1x32xf32>,
    %c0_84 = arith.constant 0 : index
    %c1_85 = arith.constant 1 : index
    %c480_86 = arith.constant 480 : index
    %83 = vector.load %arg10[%c0_84, %c1_85, %c480_86] : memref<2x16x512xf32, #tpu.memory_space<vmem>>, vector<2x14x32xf32>
    tpu.vector_store %arg10[%c0_84, %c1_85, %c480_86], %81 {strides = array<i32>} : memref<2x16x512xf32, #tpu.memory_space<vmem>>, vector<2x14x32xf32>,
    %c0_87 = arith.constant 0 : index
    %c15_88 = arith.constant 15 : index
    %c480_89 = arith.constant 480 : index
    %84 = vector.load %arg10[%c0_87, %c15_88, %c480_89] : memref<2x16x512xf32, #tpu.memory_space<vmem>>, vector<2x1x32xf32>
    tpu.vector_store %arg10[%c0_87, %c15_88, %c480_89], %37 {strides = array<i32>} : memref<2x16x512xf32, #tpu.memory_space<vmem>>, vector<2x1x32xf32>,
    %c0_90 = arith.constant 0 : index
    %c0_91 = arith.constant 0 : index
    %c0_92 = arith.constant 0 : index
    %85 = vector.load %arg10[%c0_90, %c0_91, %c0_92] : memref<2x16x512xf32, #tpu.memory_space<vmem>>, vector<2x16x512xf32>
    %86 = arith.truncf %85 : vector<2x16x512xf32> to vector<2x16x512xbf16>
    %87 = vector.shape_cast %86 : vector<2x16x512xbf16> to vector<32x512xbf16>
    %c0_93 = arith.constant 0 : index
    %c0_94 = arith.constant 0 : index
    %88 = vector.load %arg3[%c0_93, %c0_94] : memref<512x128xbf16, #tpu.memory_space<vmem>>, vector<512x128xbf16>
    %cst_95 = arith.constant dense<0.000000e+00> : vector<32x128xf32>
    %89 = tpu.matmul %87, %88, %cst_95 {dimension_numbers = #tpu.dot_dimension_numbers<[1], [0], [0], [1], [0, 0, 1, 1], [], []>} : vector<32x512xbf16>, vector<512x128xbf16>, vector<32x128xf32> -> vector<32x128xf32>
    %90 = vector.shape_cast %89 : vector<32x128xf32> to vector<2x16x128xf32>
    %91 = vector.broadcast %5 : vector<1x1x128xf32> to vector<2x16x128xf32>
    %92 = arith.addf %90, %91 : vector<2x16x128xf32>
    %cst_96 = arith.constant 0.000000e+00 : f32
    %93 = vector.broadcast %cst_96 : f32 to vector<2x16x128xf32>
    %94 = arith.maximumf %92, %93 : vector<2x16x128xf32>
    %cst_97 = arith.constant dense<0.000000e+00> : vector<2x128xf32>
    %95 = vector.multi_reduction <add>, %94, %cst_97 [1] : vector<2x16x128xf32> to vector<2x128xf32>
    %cst_98 = arith.constant 1.600000e+01 : f32
    %96 = vector.broadcast %cst_98 : f32 to vector<2x128xf32>
    %97 = arith.divf %95, %96 : vector<2x128xf32>
    %c0_99 = arith.constant 0 : index
    %c0_100 = arith.constant 0 : index
    %98 = vector.load %arg4[%c0_99, %c0_100] : memref<128x2xf32, #tpu.memory_space<vmem>>, vector<128x2xf32>
    %cst_101 = arith.constant dense<0.000000e+00> : vector<2x2xf32>
    %99 = tpu.matmul %97, %98, %cst_101 {dimension_numbers = #tpu.dot_dimension_numbers<[1], [0], [0], [1], [0, 0, 1, 1], [], []>} : vector<2x128xf32>, vector<128x2xf32>, vector<2x2xf32> -> vector<2x2xf32>
    %cst_102 = arith.constant 0.000000e+00 : f32
    %100 = vector.broadcast %cst_102 : f32 to vector<2x2xf32>
    %101 = arith.maximumf %99, %100 : vector<2x2xf32>
    %c0_103 = arith.constant 0 : index
    %c0_104 = arith.constant 0 : index
    %102 = vector.load %arg5[%c0_103, %c0_104] : memref<2x128xf32, #tpu.memory_space<vmem>>, vector<2x128xf32>
    %cst_105 = arith.constant dense<0.000000e+00> : vector<2x128xf32>
    %103 = tpu.matmul %101, %102, %cst_105 {dimension_numbers = #tpu.dot_dimension_numbers<[1], [0], [0], [1], [0, 0, 1, 1], [], []>} : vector<2x2xf32>, vector<2x128xf32>, vector<2x128xf32> -> vector<2x128xf32>
    %cst_106 = arith.constant 0.000000e+00 : f32
    %104 = vector.broadcast %cst_106 : f32 to vector<2x128xf32>
    %105 = arith.subf %104, %103 : vector<2x128xf32>
    %106 = math.exp %105 : vector<2x128xf32>
    %cst_107 = arith.constant 1.000000e+00 : f32
    %107 = vector.broadcast %cst_107 : f32 to vector<2x128xf32>
    %108 = arith.addf %107, %106 : vector<2x128xf32>
    %109 = tpu.reciprocal %108 {approx = true} : vector<2x128xf32> -> vector<2x128xf32>
    %110 = vector.shape_cast %109 : vector<2x128xf32> to vector<2x1x128xf32>
    %111 = vector.broadcast %110 : vector<2x1x128xf32> to vector<2x16x128xf32>
    %112 = arith.mulf %94, %111 : vector<2x16x128xf32>
    %113 = vector.shape_cast %112 : vector<2x16x128xf32> to vector<32x128xf32>
    %c0_108 = arith.constant 0 : index
    %c0_109 = arith.constant 0 : index
    %114 = vector.load %arg6[%c0_108, %c0_109] : memref<128x16xf32, #tpu.memory_space<vmem>>, vector<128x16xf32>
    %cst_110 = arith.constant dense<0.000000e+00> : vector<32x16xf32>
    %115 = tpu.matmul %113, %114, %cst_110 {dimension_numbers = #tpu.dot_dimension_numbers<[1], [0], [0], [1], [0, 0, 1, 1], [], []>} : vector<32x128xf32>, vector<128x16xf32>, vector<32x16xf32> -> vector<32x16xf32>
    %116 = vector.shape_cast %115 : vector<32x16xf32> to vector<2x16x16xf32>
    %117 = vector.broadcast %7 : vector<1x1x16xf32> to vector<2x16x16xf32>
    %118 = arith.addf %116, %117 : vector<2x16x16xf32>
    %cst_111 = arith.constant dense<0.000000e+00> : vector<2x16xf32>
    %119 = vector.multi_reduction <add>, %118, %cst_111 [1] : vector<2x16x16xf32> to vector<2x16xf32>
    %120 = vector.shape_cast %119 : vector<2x16xf32> to vector<2x1x16xf32>
    %cst_112 = arith.constant 1.600000e+01 : f32
    %121 = vector.broadcast %cst_112 : f32 to vector<2x1x16xf32>
    %122 = arith.divf %120, %121 : vector<2x1x16xf32>
    %cst_113 = arith.constant dense<0.000000e+00> : vector<1x16xf32>
    %123 = vector.multi_reduction <add>, %122, %cst_113 [0] : vector<2x1x16xf32> to vector<1x16xf32>
    %124 = vector.shape_cast %123 : vector<1x16xf32> to vector<1x1x16xf32>
    %cst_114 = arith.constant 2.000000e+00 : f32
    %125 = vector.broadcast %cst_114 : f32 to vector<1x1x16xf32>
    %126 = arith.divf %124, %125 : vector<1x1x16xf32>
    %127 = vector.broadcast %126 : vector<1x1x16xf32> to vector<2x16x16xf32>
    %128 = arith.subf %118, %127 : vector<2x16x16xf32>
    %129 = arith.mulf %128, %128 : vector<2x16x16xf32>
    %cst_115 = arith.constant dense<0.000000e+00> : vector<2x16xf32>
    %130 = vector.multi_reduction <add>, %129, %cst_115 [1] : vector<2x16x16xf32> to vector<2x16xf32>
    %131 = vector.shape_cast %130 : vector<2x16xf32> to vector<2x1x16xf32>
    %cst_116 = arith.constant 1.600000e+01 : f32
    %132 = vector.broadcast %cst_116 : f32 to vector<2x1x16xf32>
    %133 = arith.divf %131, %132 : vector<2x1x16xf32>
    %cst_117 = arith.constant dense<0.000000e+00> : vector<1x16xf32>
    %134 = vector.multi_reduction <add>, %133, %cst_117 [0] : vector<2x1x16xf32> to vector<1x16xf32>
    %135 = vector.shape_cast %134 : vector<1x16xf32> to vector<1x1x16xf32>
    %cst_118 = arith.constant 2.000000e+00 : f32
    %136 = vector.broadcast %cst_118 : f32 to vector<1x1x16xf32>
    %137 = arith.divf %135, %136 : vector<1x1x16xf32>
    %cst_119 = arith.constant 9.99999974E-6 : f32
    %138 = vector.broadcast %cst_119 : f32 to vector<1x1x16xf32>
    %139 = arith.addf %137, %138 : vector<1x1x16xf32>
    %140 = math.rsqrt %139 : vector<1x1x16xf32>
    %141 = vector.broadcast %140 : vector<1x1x16xf32> to vector<2x16x16xf32>
    %142 = arith.mulf %128, %141 : vector<2x16x16xf32>
    %143 = vector.broadcast %9 : vector<1x1x16xf32> to vector<2x16x16xf32>
    %144 = arith.mulf %142, %143 : vector<2x16x16xf32>
    %145 = vector.broadcast %11 : vector<1x1x16xf32> to vector<2x16x16xf32>
    %146 = arith.addf %144, %145 : vector<2x16x16xf32>
    %cst_120 = arith.constant 0.000000e+00 : f32
    %147 = vector.broadcast %cst_120 : f32 to vector<2x16x16xf32>
    %148 = arith.maximumf %146, %147 : vector<2x16x16xf32>
    %cst_121 = arith.constant 0.000000e+00 : f32
    %149 = vector.broadcast %cst_121 : f32 to vector<2x2x16xf32>
    %c0_122 = arith.constant 0 : index
    %c0_123 = arith.constant 0 : index
    %c0_124 = arith.constant 0 : index
    %150 = vector.load %arg11[%c0_122, %c0_123, %c0_124] : memref<2x16x48xf32, #tpu.memory_space<vmem>>, vector<2x2x16xf32>
    tpu.vector_store %arg11[%c0_122, %c0_123, %c0_124], %149 {strides = array<i32>} : memref<2x16x48xf32, #tpu.memory_space<vmem>>, vector<2x2x16xf32>,
    %151 = vector.extract_strided_slice %148 {offsets = [0, 0, 0], sizes = [2, 14, 16], strides = [1, 1, 1]} : vector<2x16x16xf32> to vector<2x14x16xf32>
    %c0_125 = arith.constant 0 : index
    %c2_126 = arith.constant 2 : index
    %c0_127 = arith.constant 0 : index
    %152 = vector.load %arg11[%c0_125, %c2_126, %c0_127] : memref<2x16x48xf32, #tpu.memory_space<vmem>>, vector<2x14x16xf32>
    tpu.vector_store %arg11[%c0_125, %c2_126, %c0_127], %151 {strides = array<i32>} : memref<2x16x48xf32, #tpu.memory_space<vmem>>, vector<2x14x16xf32>,
    %c0_128 = arith.constant 0 : index
    %c0_129 = arith.constant 0 : index
    %c16 = arith.constant 16 : index
    %153 = vector.load %arg11[%c0_128, %c0_129, %c16] : memref<2x16x48xf32, #tpu.memory_space<vmem>>, vector<2x16x16xf32>
    tpu.vector_store %arg11[%c0_128, %c0_129, %c16], %148 {strides = array<i32>} : memref<2x16x48xf32, #tpu.memory_space<vmem>>, vector<2x16x16xf32>,
    %154 = vector.extract_strided_slice %148 {offsets = [0, 2, 0], sizes = [2, 14, 16], strides = [1, 1, 1]} : vector<2x16x16xf32> to vector<2x14x16xf32>
    %c0_130 = arith.constant 0 : index
    %c0_131 = arith.constant 0 : index
    %c32_132 = arith.constant 32 : index
    %155 = vector.load %arg11[%c0_130, %c0_131, %c32_132] : memref<2x16x48xf32, #tpu.memory_space<vmem>>, vector<2x14x16xf32>
    tpu.vector_store %arg11[%c0_130, %c0_131, %c32_132], %154 {strides = array<i32>} : memref<2x16x48xf32, #tpu.memory_space<vmem>>, vector<2x14x16xf32>,
    %c0_133 = arith.constant 0 : index
    %c14_134 = arith.constant 14 : index
    %c32_135 = arith.constant 32 : index
    %156 = vector.load %arg11[%c0_133, %c14_134, %c32_135] : memref<2x16x48xf32, #tpu.memory_space<vmem>>, vector<2x2x16xf32>
    tpu.vector_store %arg11[%c0_133, %c14_134, %c32_135], %149 {strides = array<i32>} : memref<2x16x48xf32, #tpu.memory_space<vmem>>, vector<2x2x16xf32>,
    %c0_136 = arith.constant 0 : index
    %c0_137 = arith.constant 0 : index
    %c0_138 = arith.constant 0 : index
    %157 = vector.load %arg11[%c0_136, %c0_137, %c0_138] : memref<2x16x48xf32, #tpu.memory_space<vmem>>, vector<2x16x48xf32>
    %158 = vector.shape_cast %157 : vector<2x16x48xf32> to vector<32x48xf32>
    %c0_139 = arith.constant 0 : index
    %c0_140 = arith.constant 0 : index
    %159 = vector.load %arg7[%c0_139, %c0_140] : memref<48x32xf32, #tpu.memory_space<vmem>>, vector<48x32xf32>
    %cst_141 = arith.constant dense<0.000000e+00> : vector<32x32xf32>
    %160 = tpu.matmul %158, %159, %cst_141 {dimension_numbers = #tpu.dot_dimension_numbers<[1], [0], [0], [1], [0, 0, 1, 1], [], []>} : vector<32x48xf32>, vector<48x32xf32>, vector<32x32xf32> -> vector<32x32xf32>
    %161 = vector.shape_cast %160 : vector<32x32xf32> to vector<2x16x32xf32>
    %162 = vector.broadcast %13 : vector<1x1x32xf32> to vector<2x16x32xf32>
    %163 = arith.addf %161, %162 : vector<2x16x32xf32>
    %cst_142 = arith.constant dense<0.000000e+00> : vector<2x32xf32>
    %164 = vector.multi_reduction <add>, %163, %cst_142 [1] : vector<2x16x32xf32> to vector<2x32xf32>
    %165 = vector.shape_cast %164 : vector<2x32xf32> to vector<2x1x32xf32>
    %cst_143 = arith.constant 1.600000e+01 : f32
    %166 = vector.broadcast %cst_143 : f32 to vector<2x1x32xf32>
    %167 = arith.divf %165, %166 : vector<2x1x32xf32>
    %cst_144 = arith.constant dense<0.000000e+00> : vector<1x32xf32>
    %168 = vector.multi_reduction <add>, %167, %cst_144 [0] : vector<2x1x32xf32> to vector<1x32xf32>
    %169 = vector.shape_cast %168 : vector<1x32xf32> to vector<1x1x32xf32>
    %cst_145 = arith.constant 2.000000e+00 : f32
    %170 = vector.broadcast %cst_145 : f32 to vector<1x1x32xf32>
    %171 = arith.divf %169, %170 : vector<1x1x32xf32>
    %172 = vector.broadcast %171 : vector<1x1x32xf32> to vector<2x16x32xf32>
    %173 = arith.subf %163, %172 : vector<2x16x32xf32>
    %174 = arith.mulf %173, %173 : vector<2x16x32xf32>
    %cst_146 = arith.constant dense<0.000000e+00> : vector<2x32xf32>
    %175 = vector.multi_reduction <add>, %174, %cst_146 [1] : vector<2x16x32xf32> to vector<2x32xf32>
    %176 = vector.shape_cast %175 : vector<2x32xf32> to vector<2x1x32xf32>
    %cst_147 = arith.constant 1.600000e+01 : f32
    %177 = vector.broadcast %cst_147 : f32 to vector<2x1x32xf32>
    %178 = arith.divf %176, %177 : vector<2x1x32xf32>
    %cst_148 = arith.constant dense<0.000000e+00> : vector<1x32xf32>
    %179 = vector.multi_reduction <add>, %178, %cst_148 [0] : vector<2x1x32xf32> to vector<1x32xf32>
    %180 = vector.shape_cast %179 : vector<1x32xf32> to vector<1x1x32xf32>
    %cst_149 = arith.constant 2.000000e+00 : f32
    %181 = vector.broadcast %cst_149 : f32 to vector<1x1x32xf32>
    %182 = arith.divf %180, %181 : vector<1x1x32xf32>
    %cst_150 = arith.constant 9.99999974E-6 : f32
    %183 = vector.broadcast %cst_150 : f32 to vector<1x1x32xf32>
    %184 = arith.addf %182, %183 : vector<1x1x32xf32>
    %185 = math.rsqrt %184 : vector<1x1x32xf32>
    %186 = vector.broadcast %185 : vector<1x1x32xf32> to vector<2x16x32xf32>
    %187 = arith.mulf %173, %186 : vector<2x16x32xf32>
    %188 = vector.broadcast %15 : vector<1x1x32xf32> to vector<2x16x32xf32>
    %189 = arith.mulf %187, %188 : vector<2x16x32xf32>
    %190 = vector.broadcast %17 : vector<1x1x32xf32> to vector<2x16x32xf32>
    %191 = arith.addf %189, %190 : vector<2x16x32xf32>
    %192 = arith.addf %191, %0 : vector<2x16x32xf32>
    %c0_151 = arith.constant 0 : index
    %c0_152 = arith.constant 0 : index
    %c0_153 = arith.constant 0 : index
    %193 = vector.load %arg9[%c0_151, %c0_152, %c0_153] : memref<2x16x32xf32, #tpu.memory_space<vmem>>, vector<2x16x32xf32>
    tpu.vector_store %arg9[%c0_151, %c0_152, %c0_153], %192 {strides = array<i32>} : memref<2x16x32xf32, #tpu.memory_space<vmem>>, vector<2x16x32xf32>,
    return
  }
}

</mosaic_0001>

<llo_original>
// kernel: improved_res2dilated_conv1d.1
$region0: #{improved_res2dilated_conv1d.1}
  #allocation0 [shape = 'u32[]', space=smem, size = 0x4, offset = 0x4, fixed_abs, tag = 'smem constant byte address 0x4 - core index']
  #allocation1 [shape = 'u32[144,128]{1,0:T(1,128)}', space=vmem, size = 0x12000, scoped, tag = 'internal scratch']
  #allocation2 [shape = 'f32[2,16,512]{2,1,0:T(8,128)}', space=vmem, size = 0x10000, scoped, tag = 'scratch operand']
  #allocation3 [shape = 'f32[2,16,48]{2,1,0:T(8,128)}', space=vmem, size = 0x4000, scoped, tag = 'scratch operand']
  %s0 = inlined_call_operand.vmem [shape: f32[2,16,32], index: 0, kind: input, shape index: {}]
  %s1 = inlined_call_operand.vmem [shape: f32[2,22,32], index: 1, kind: input, shape index: {}]
  %s2 = inlined_call_operand.vmem [shape: bf16[32,64], index: 2, kind: input, shape index: {}]
  %s3 = inlined_call_operand.vmem [shape: bf16[512,128], index: 3, kind: input, shape index: {}]
  %s4 = inlined_call_operand.vmem [shape: f32[128,2], index: 4, kind: input, shape index: {}]
  %s5 = inlined_call_operand.vmem [shape: f32[2,128], index: 5, kind: input, shape index: {}]
  %s6 = inlined_call_operand.vmem [shape: f32[128,16], index: 6, kind: input, shape index: {}]
  %s7 = inlined_call_operand.vmem [shape: f32[48,32], index: 7, kind: input, shape index: {}]
  %s8 = inlined_call_operand.vmem [shape: f32[8,128], index: 8, kind: input, shape index: {}]
  %s9 = inlined_call_operand.hbm [shape: f32[2,16,32], index: 9, kind: output, shape index: {}]
  %s10 = sld [smem:[#allocation0]]
  $region46: #{improved_res2dilated_conv1d.1} parent=0
    _
  %s12 = ssub.s32 1, %s10
  %s13 = scalar_select 0, %s12, %s10
  $region1: #{improved_res2dilated_conv1d.1} parent=0
    #allocation4 [shape = 'u8[16384]{0}', space=vmem, size = 0x4000, scoped, tag = 'output window, operand 0, single buffered']
    #allocation5 [shape = 's32[1]{0}', space=sflag, size = 0x4, scoped, tag = 'scoped memory for improved_res2dilated_conv1d.1']
    %14 = vsyncpa [#allocation5], 0
    // Predicated region
    $region2: #{improved_res2dilated_conv1d.1} parent=1 // pred_check
      _
    $region3: #{improved_res2dilated_conv1d.1} parent=1 // pred_check_branch
      %16 = sbr.rel (0) target = $region5
    $region4: #{improved_res2dilated_conv1d.1} parent=1 // pred_region
      _
    $region5: #{improved_res2dilated_conv1d.1} parent=1 // pred_fallthru
      _
    // Predicated region
    $region6: #{improved_res2dilated_conv1d.1} parent=1 // pred_check
      _
    $region7: #{improved_res2dilated_conv1d.1} parent=1 // pred_check_branch
      %18 = sbr.rel (0) target = $region9
    $region8: #{improved_res2dilated_conv1d.1} parent=1 // pred_region
      _
    $region9: #{improved_res2dilated_conv1d.1} parent=1 // pred_fallthru
      _
    // Predicated region
    $region10: #{improved_res2dilated_conv1d.1} parent=1 // pred_check
      _
    $region11: #{improved_res2dilated_conv1d.1} parent=1 // pred_check_branch
      %20 = sbr.rel (0) target = $region13
    $region12: #{improved_res2dilated_conv1d.1} parent=1 // pred_region
      _
    $region13: #{improved_res2dilated_conv1d.1} parent=1 // pred_fallthru
      _
    // Predicated region
    $region14: #{improved_res2dilated_conv1d.1} parent=1 // pred_check
      _
    $region15: #{improved_res2dilated_conv1d.1} parent=1 // pred_check_branch
      %22 = sbr.rel (0) target = $region17
    $region16: #{improved_res2dilated_conv1d.1} parent=1 // pred_region
      _
    $region17: #{improved_res2dilated_conv1d.1} parent=1 // pred_fallthru
      _
    // Predicated region
    $region18: #{improved_res2dilated_conv1d.1} parent=1 // pred_check
      _
    $region19: #{improved_res2dilated_conv1d.1} parent=1 // pred_check_branch
      %24 = sbr.rel (0) target = $region21
    $region20: #{improved_res2dilated_conv1d.1} parent=1 // pred_region
      _
    $region21: #{improved_res2dilated_conv1d.1} parent=1 // pred_fallthru
      _
    // Predicated region
    $region22: #{improved_res2dilated_conv1d.1} parent=1 // pred_check
      _
    $region23: #{improved_res2dilated_conv1d.1} parent=1 // pred_check_branch
      %26 = sbr.rel (0) target = $region25
    $region24: #{improved_res2dilated_conv1d.1} parent=1 // pred_region
      _
    $region25: #{improved_res2dilated_conv1d.1} parent=1 // pred_fallthru
      _
    // Predicated region
    $region26: #{improved_res2dilated_conv1d.1} parent=1 // pred_check
      _
    $region27: #{improved_res2dilated_conv1d.1} parent=1 // pred_check_branch
      %28 = sbr.rel (0) target = $region29
    $region28: #{improved_res2dilated_conv1d.1} parent=1 // pred_region
      _
    $region29: #{improved_res2dilated_conv1d.1} parent=1 // pred_fallthru
      _
    // Predicated region
    $region30: #{improved_res2dilated_conv1d.1} parent=1 // pred_check
      _
    $region31: #{improved_res2dilated_conv1d.1} parent=1 // pred_check_branch
      %30 = sbr.rel (0) target = $region33
    $region32: #{improved_res2dilated_conv1d.1} parent=1 // pred_region
      _
    $region33: #{improved_res2dilated_conv1d.1} parent=1 // pred_fallthru
      _
    // Predicated region
    $region34: #{improved_res2dilated_conv1d.1} parent=1 // pred_check
      _
    $region35: #{improved_res2dilated_conv1d.1} parent=1 // pred_check_branch
      %32 = sbr.rel (0) target = $region37
    $region36: #{improved_res2dilated_conv1d.1} parent=1 // pred_region
      _
    $region37: #{improved_res2dilated_conv1d.1} parent=1 // pred_fallthru
      _
    %v34 = vld [vmem:[%s0] sm:$0xff]
    %v35 = vld [vmem:[%s0 + $0x8] sm:$0xff]
    %v36 = vld [vmem:[%s0 + $0x10] sm:$0xff]
    %v37 = vld [vmem:[%s0 + $0x18] sm:$0xff]
    %v38 = vld [vmem:[%s8] sm:$0xff]
    %v39 = vpack.c.bf16 %v35, %v34
    %v40 = vpack.c.bf16 %v37, %v36
    %v41 = vld [vmem:[%s2] sm:$0xf]
    %v42 = vld [vmem:[%s2 + $0x4] sm:$0xf]
    %v43 = vld [vmem:[%s2 + $0x8] sm:$0xf]
    %v44 = vld [vmem:[%s2 + $0xc] sm:$0xf]
    %v49 = vunpack.c.l.b16 %v41
    %v50 = vunpack.c.l.b16 %v42
    %v51 = vunpack.c.l.b16 %v43
    %v52 = vunpack.c.l.b16 %v44
    %v53 = vpack.c.b16 %v50, %v49
    %v54 = vpack.c.b16 %v52, %v51
    %vm57 = vcmask 261120
    %v59 = vsel %vm57, %v39, 0
    %v62 = vsel %vm57, %v40, 0
    %64 = vmatprep.subr.bf16.mxu0 0
    %65 = vmatpush1.bf16.msra.mxu0 0
    %66 = vmatprep.subr.bf16.mxu0 0
    %67 = vmatpush1.bf16.msra.mxu0 0
    %68 = vmatprep.subr.bf16.mxu0 0
    %69 = vmatpush1.bf16.msra.mxu0 0
    %70 = vmatprep.subr.bf16.mxu0 0
    %71 = vmatpush1.bf16.msra.mxu0 0
    %72 = vmatprep.subr.bf16.mxu0 0
    %73 = vmatpush1.bf16.msra.mxu0 0
    %74 = vmatprep.subr.bf16.mxu0 0
    %75 = vmatpush1.bf16.msra.mxu0 0
    %76 = vmatprep.subr.bf16.mxu0 0
    %77 = vmatpush1.bf16.msra.mxu0 %v54
    %78 = vmatprep.subr.bf16.mxu0 0
    %79 = vmatpush1.bf16.msra.mxu0 %v53
    %80 = vmatprep.subr.bf16.mxu0 0
    %81 = vmatpush2.bf16.msra.mxu0 0
    %82 = vmatprep.subr.bf16.mxu0 0
    %83 = vmatpush2.bf16.msra.mxu0 0
    %84 = vmatprep.subr.bf16.mxu0 0
    %85 = vmatpush2.bf16.msra.mxu0 0
    %86 = vmatprep.subr.bf16.mxu0 0
    %87 = vmatpush2.bf16.msra.mxu0 0
    %88 = vmatprep.subr.bf16.mxu0 0
    %89 = vmatpush2.bf16.msra.mxu0 0
    %90 = vmatprep.subr.bf16.mxu0 0
    %91 = vmatpush2.bf16.msra.mxu0 0
    %92 = vmatprep.subr.bf16.mxu0 0
    %93 = vmatpush2.bf16.msra.mxu0 0
    %94 = vmatprep.subr.bf16.mxu0 0
    %95 = vmatpush2.bf16.msra.mxu0 0
    %96 = vmatprep.mubr.bf16.mxu0 0
    %97 = vmatmul.mubr.bf16.gmra.mxu0 %v59
    %v98 = vpop.f32.mrf.mxu0
    %v99 = vadd.f32 0.0, %v98
    %v100 = vpop.f32.mrf.mxu0
    %v101 = vpop.f32.mrf.mxu0
    %v102 = vadd.f32 0.0, %v101
    %v103 = vpop.f32.mrf.mxu0
    %104 = vmatprep.mubr.bf16.mxu0 0
    %105 = vmatmul.mubr.bf16.gmra.mxu0 %v62
    %v106 = vpop.f32.mrf.mxu0
    %v107 = vadd.f32 0.0, %v106
    %v108 = vpop.f32.mrf.mxu0
    %v109 = vpop.f32.mrf.mxu0
    %v110 = vadd.f32 0.0, %v109
    %v111 = vpop.f32.mrf.mxu0
    %112 = vdwg.mxu0
    %v113 = vlaneseq
    %v114 = vshrl.u32 %v113, 7
    %v115 = vsub.s32 0, %v114
    %v116 = vrot.slane %v38, %v115
    %v117 = vadd.f32 %v99, %v116
    %v118 = vadd.f32 %v102, %v116
    %v119 = vadd.f32 %v107, %v116
    %v120 = vadd.f32 %v110, %v116
    %v121 = vmax.f32 %v117, 0.0
    %v122 = vmax.f32 %v118, 0.0
    %v123 = vmax.f32 %v119, 0.0
    %v124 = vmax.f32 %v120, 0.0
    %v125 = vmax.f32 %v38, 0.0
    %vm126 = vcmask 253952
    %127 = vst.msk [vmem:[#allocation2] sm:$0x1] %vm126, %v125
    %128 = vst.msk [vmem:[#allocation2 + $0x40] sm:$0x1] %vm126, %v125
    %vm133 = vcmask 1040384
    %v134 = vrot.slane %v121, 7
    %v135 = vrot.slane %v122, 7
    %v136 = vsel %vm133, %v134, %v135
    %v137 = vrot.slane %v123, 7
    %v138 = vrot.slane %v124, 7
    %v139 = vsel %vm133, %v137, %v138
    %vm144 = vcmask 261121
    %145 = vst.msk [vmem:[#allocation2] sm:$0xfe] %vm144, %v134
    %146 = vst.msk [vmem:[#allocation2 + $0x20] sm:$0xff] %vm57, %v136
    %147 = vst.msk [vmem:[#allocation2 + $0x40] sm:$0xfe] %vm144, %v137
    %148 = vst.msk [vmem:[#allocation2 + $0x60] sm:$0xff] %vm57, %v139
    %149 = vrot.lane.b32.xlu0 %v121, 32
    %v150 = vpop.permute.xlu0 %149
    %151 = vrot.lane.b32.xlu0 %v122, 32
    %v152 = vpop.permute.xlu0 %151
    %153 = vrot.lane.b32.xlu0 %v123, 32
    %v154 = vpop.permute.xlu0 %153
    %155 = vrot.lane.b32.xlu0 %v124, 32
    %v156 = vpop.permute.xlu0 %155
    %vm161 = vcmask 523520
    %162 = vst.msk [vmem:[#allocation2] sm:$0xff] %vm161, %v150
    %163 = vst.msk [vmem:[#allocation2 + $0x20] sm:$0xff] %vm161, %v152
    %164 = vst.msk [vmem:[#allocation2 + $0x40] sm:$0xff] %vm161, %v154
    %165 = vst.msk [vmem:[#allocation2 + $0x60] sm:$0xff] %vm161, %v156
    %vm166 = vcmask 1046528
    %v167 = vrot.slane %v121, 1
    %v168 = vrot.slane %v122, 1
    %v169 = vsel %vm166, %v167, %v168
    %v170 = vrot.slane %v123, 1
    %v171 = vrot.slane %v124, 1
    %v172 = vsel %vm166, %v170, %v171
    %173 = vrot.lane.b32.xlu0 %v169, 64
    %v174 = vpop.permute.xlu0 %173
    %175 = vrot.lane.b32.xlu0 %v168, 64
    %v176 = vpop.permute.xlu0 %175
    %177 = vrot.lane.b32.xlu0 %v172, 64
    %v178 = vpop.permute.xlu0 %177
    %179 = vrot.lane.b32.xlu0 %v171, 64
    %v180 = vpop.permute.xlu0 %179
    %vm185 = vcmask 785920
    %186 = vst.msk [vmem:[#allocation2] sm:$0xff] %vm185, %v174
    %vm187 = vcmask 784896
    %188 = vst.msk [vmem:[#allocation2 + $0x20] sm:$0x7f] %vm187, %v176
    %189 = vst.msk [vmem:[#allocation2 + $0x40] sm:$0xff] %vm185, %v178
    %190 = vst.msk [vmem:[#allocation2 + $0x60] sm:$0x7f] %vm187, %v180
    %192 = vrot.lane.b32.xlu0 %v125, 64
    %v193 = vpop.permute.xlu0 %192
    %vm195 = vcmask 778752
    %196 = vst.msk [vmem:[#allocation2 + $0x27] sm:$0x1] %vm195, %v193
    %197 = vst.msk [vmem:[#allocation2 + $0x67] sm:$0x1] %vm195, %v193
    %vm198 = vcmask 1043200
    %199 = vst.msk [vmem:[#allocation2] sm:$0x7] %vm198, 0.0
    %200 = vst.msk [vmem:[#allocation2 + $0x40] sm:$0x7] %vm198, 0.0
    %vm201 = vcmask 1041152
    %202 = vst.msk [vmem:[#allocation2 + $0x3] sm:$0x1] %vm201, %v193
    %203 = vst.msk [vmem:[#allocation2 + $0x43] sm:$0x1] %vm201, %v193
    %vm204 = vcmask 1043456
    %v205 = vrot.slane %v121, 4
    %v206 = vrot.slane %v122, 4
    %v207 = vsel %vm204, %v205, %v206
    %v208 = vrot.slane %v123, 4
    %v209 = vrot.slane %v124, 4
    %v210 = vsel %vm204, %v208, %v209
    %211 = vrot.lane.b32.xlu0 %v205, 64
    %v212 = vpop.permute.xlu0 %211
    %213 = vrot.lane.b32.xlu0 %v207, 64
    %v214 = vpop.permute.xlu0 %213
    %215 = vrot.lane.b32.xlu0 %v208, 64
    %v216 = vpop.permute.xlu0 %215
    %217 = vrot.lane.b32.xlu0 %v210, 64
    %v218 = vpop.permute.xlu0 %217
    %vm223 = vcmask 1048324
    %224 = vst.msk [vmem:[#allocation2] sm:$0xf0] %vm223, %v212
    %vm225 = vcmask 1048320
    %226 = vst.msk [vmem:[#allocation2 + $0x20] sm:$0xff] %vm225, %v214
    %227 = vst.msk [vmem:[#allocation2 + $0x40] sm:$0xf0] %vm223, %v216
    %228 = vst.msk [vmem:[#allocation2 + $0x60] sm:$0xff] %vm225, %v218
    %229 = vst.msk [vmem:[#allocation2 + $0x8] sm:$0x1] %vm126, 0.0
    %230 = vst.msk [vmem:[#allocation2 + $0x48] sm:$0x1] %vm126, 0.0
    %231 = vrot.lane.b32.xlu0 %v125, 96
    %v232 = vpop.permute.xlu0 %231
    %234 = vst.msk [vmem:[#allocation2 + $0x9] sm:$0x1] %vm126, %v232
    %235 = vst.msk [vmem:[#allocation2 + $0x49] sm:$0x1] %vm126, %v232
    %vm236 = vcmask 1041408
    %v237 = vrot.slane %v121, 6
    %v238 = vrot.slane %v122, 6
    %v239 = vsel %vm236, %v237, %v238
    %v240 = vrot.slane %v123, 6
    %v241 = vrot.slane %v124, 6
    %v242 = vsel %vm236, %v240, %v241
    %243 = vrot.lane.b32.xlu0 %v237, 96
    %v244 = vpop.permute.xlu0 %243
    %245 = vrot.lane.b32.xlu0 %v239, 96
    %v246 = vpop.permute.xlu0 %245
    %247 = vrot.lane.b32.xlu0 %v240, 96
    %v248 = vpop.permute.xlu0 %247
    %249 = vrot.lane.b32.xlu0 %v242, 96
    %v250 = vpop.permute.xlu0 %249
    %vm255 = vcmask 261122
    %256 = vst.msk [vmem:[#allocation2 + $0x8] sm:$0xfc] %vm255, %v244
    %257 = vst.msk [vmem:[#allocation2 + $0x28] sm:$0xff] %vm57, %v246
    %258 = vst.msk [vmem:[#allocation2 + $0x48] sm:$0xfc] %vm255, %v248
    %259 = vst.msk [vmem:[#allocation2 + $0x68] sm:$0xff] %vm57, %v250
    %260 = vst.msk [vmem:[#allocation2 + $0x8] sm:$0xff] %vm161, %v121
    %261 = vst.msk [vmem:[#allocation2 + $0x28] sm:$0xff] %vm161, %v122
    %262 = vst.msk [vmem:[#allocation2 + $0x48] sm:$0xff] %vm161, %v123
    %263 = vst.msk [vmem:[#allocation2 + $0x68] sm:$0xff] %vm161, %v124
    %vm264 = vcmask 1045504
    %v265 = vrot.slane %v121, 2
    %v266 = vrot.slane %v122, 2
    %v267 = vsel %vm264, %v265, %v266
    %v268 = vrot.slane %v123, 2
    %v269 = vrot.slane %v124, 2
    %v270 = vsel %vm264, %v268, %v269
    %271 = vrot.lane.b32.xlu0 %v267, 32
    %v272 = vpop.permute.xlu0 %271
    %273 = vrot.lane.b32.xlu0 %v266, 32
    %v274 = vpop.permute.xlu0 %273
    %275 = vrot.lane.b32.xlu0 %v270, 32
    %v276 = vpop.permute.xlu0 %275
    %277 = vrot.lane.b32.xlu0 %v269, 32
    %v278 = vpop.permute.xlu0 %277
    %283 = vst.msk [vmem:[#allocation2 + $0x8] sm:$0xff] %vm185, %v272
    %vm284 = vcmask 783872
    %285 = vst.msk [vmem:[#allocation2 + $0x28] sm:$0x3f] %vm284, %v274
    %286 = vst.msk [vmem:[#allocation2 + $0x48] sm:$0xff] %vm185, %v276
    %287 = vst.msk [vmem:[#allocation2 + $0x68] sm:$0x3f] %vm284, %v278
    %288 = vrot.lane.b32.xlu0 %v125, 32
    %v289 = vpop.permute.xlu0 %288
    %291 = vst.msk [vmem:[#allocation2 + $0x2e] sm:$0x1] %vm195, %v289
    %292 = vst.msk [vmem:[#allocation2 + $0x6e] sm:$0x1] %vm195, %v289
    %293 = vst.msk [vmem:[#allocation2 + $0x2f] sm:$0x1] %vm195, 0.0
    %294 = vst.msk [vmem:[#allocation2 + $0x6f] sm:$0x1] %vm195, 0.0
    %295 = vrot.lane.b32.xlu0 %v206, 64
    %v296 = vpop.permute.xlu0 %295
    %297 = vrot.lane.b32.xlu0 %v209, 64
    %v298 = vpop.permute.xlu0 %297
    %301 = vst.msk [vmem:[#allocation2 + $0x8] sm:$0xff] %vm225, %v214
    %vm302 = vcmask 1044224
    %303 = vst.msk [vmem:[#allocation2 + $0x28] sm:$0xf] %vm302, %v296
    %304 = vst.msk [vmem:[#allocation2 + $0x48] sm:$0xff] %vm225, %v218
    %305 = vst.msk [vmem:[#allocation2 + $0x68] sm:$0xf] %vm302, %v298
    %306 = vst.msk [vmem:[#allocation2 + $0x2c] sm:$0x1] %vm201, %v193
    %307 = vst.msk [vmem:[#allocation2 + $0x6c] sm:$0x1] %vm201, %v193
    %vm308 = vcmask 1048325
    %309 = vst.msk [vmem:[#allocation2 + $0x28] sm:$0xe0] %vm308, 0.0
    %310 = vst.msk [vmem:[#allocation2 + $0x68] sm:$0xe0] %vm308, 0.0
    %v311 = vld [vmem:[%s1] sm:$0xff]
    %v312 = vld [vmem:[%s1 + $0x8] sm:$0xff]
    %v313 = vld [vmem:[%s1 + $0x18] sm:$0xff]
    %v314 = vld [vmem:[%s1 + $0x20] sm:$0xff]
    %315 = vst.msk [vmem:[#allocation2 + $0x10] sm:$0xff] %vm57, %v311
    %316 = vst.msk [vmem:[#allocation2 + $0x30] sm:$0xff] %vm57, %v312
    %317 = vst.msk [vmem:[#allocation2 + $0x50] sm:$0xff] %vm57, %v313
    %318 = vst.msk [vmem:[#allocation2 + $0x70] sm:$0xff] %vm57, %v314
    %v319 = vld [vmem:[%s1 + $0x1] sm:$0xff]
    %v320 = vld [vmem:[%s1 + $0x9] sm:$0xff]
    %v321 = vld [vmem:[%s1 + $0x19] sm:$0xff]
    %v322 = vld [vmem:[%s1 + $0x21] sm:$0xff]
    %327 = vrot.lane.b32.xlu0 %v319, 32
    %v328 = vpop.permute.xlu0 %327
    %329 = vrot.lane.b32.xlu0 %v320, 32
    %v330 = vpop.permute.xlu0 %329
    %331 = vrot.lane.b32.xlu0 %v321, 32
    %v332 = vpop.permute.xlu0 %331
    %333 = vrot.lane.b32.xlu0 %v322, 32
    %v334 = vpop.permute.xlu0 %333
    %339 = vst.msk [vmem:[#allocation2 + $0x10] sm:$0xff] %vm161, %v328
    %340 = vst.msk [vmem:[#allocation2 + $0x30] sm:$0xff] %vm161, %v330
    %341 = vst.msk [vmem:[#allocation2 + $0x50] sm:$0xff] %vm161, %v332
    %342 = vst.msk [vmem:[#allocation2 + $0x70] sm:$0xff] %vm161, %v334
    %v343 = vld [vmem:[%s1 + $0x2] sm:$0xff]
    %v344 = vld [vmem:[%s1 + $0xa] sm:$0xff]
    %v345 = vld [vmem:[%s1 + $0x1a] sm:$0xff]
    %v346 = vld [vmem:[%s1 + $0x22] sm:$0xff]
    %351 = vrot.lane.b32.xlu0 %v343, 64
    %v352 = vpop.permute.xlu0 %351
    %353 = vrot.lane.b32.xlu0 %v344, 64
    %v354 = vpop.permute.xlu0 %353
    %355 = vrot.lane.b32.xlu0 %v345, 64
    %v356 = vpop.permute.xlu0 %355
    %357 = vrot.lane.b32.xlu0 %v346, 64
    %v358 = vpop.permute.xlu0 %357
    %363 = vst.msk [vmem:[#allocation2 + $0x10] sm:$0xff] %vm185, %v352
    %364 = vst.msk [vmem:[#allocation2 + $0x30] sm:$0xff] %vm185, %v354
    %365 = vst.msk [vmem:[#allocation2 + $0x50] sm:$0xff] %vm185, %v356
    %366 = vst.msk [vmem:[#allocation2 + $0x70] sm:$0xff] %vm185, %v358
    %v367 = vld [vmem:[%s1 + $0x3] sm:$0xff]
    %v368 = vld [vmem:[%s1 + $0xb] sm:$0xff]
    %v369 = vld [vmem:[%s1 + $0x1b] sm:$0xff]
    %v370 = vld [vmem:[%s1 + $0x23] sm:$0xff]
    %375 = vrot.lane.b32.xlu0 %v367, 96
    %v376 = vpop.permute.xlu0 %375
    %377 = vrot.lane.b32.xlu0 %v368, 96
    %v378 = vpop.permute.xlu0 %377
    %379 = vrot.lane.b32.xlu0 %v369, 96
    %v380 = vpop.permute.xlu0 %379
    %381 = vrot.lane.b32.xlu0 %v370, 96
    %v382 = vpop.permute.xlu0 %381
    %387 = vst.msk [vmem:[#allocation2 + $0x10] sm:$0xff] %vm225, %v376
    %388 = vst.msk [vmem:[#allocation2 + $0x30] sm:$0xff] %vm225, %v378
    %389 = vst.msk [vmem:[#allocation2 + $0x50] sm:$0xff] %vm225, %v380
    %390 = vst.msk [vmem:[#allocation2 + $0x70] sm:$0xff] %vm225, %v382
    %v391 = vld [vmem:[%s1 + $0x4] sm:$0xff]
    %v392 = vld [vmem:[%s1 + $0xc] sm:$0xff]
    %v393 = vld [vmem:[%s1 + $0x1c] sm:$0xff]
    %v394 = vld [vmem:[%s1 + $0x24] sm:$0xff]
    %395 = vst.msk [vmem:[#allocation2 + $0x18] sm:$0xff] %vm57, %v391
    %396 = vst.msk [vmem:[#allocation2 + $0x38] sm:$0xff] %vm57, %v392
    %397 = vst.msk [vmem:[#allocation2 + $0x58] sm:$0xff] %vm57, %v393
    %398 = vst.msk [vmem:[#allocation2 + $0x78] sm:$0xff] %vm57, %v394
    %v399 = vld [vmem:[%s1 + $0x5] sm:$0xff]
    %v400 = vld [vmem:[%s1 + $0xd] sm:$0xff]
    %v401 = vld [vmem:[%s1 + $0x1d] sm:$0xff]
    %v402 = vld [vmem:[%s1 + $0x25] sm:$0xff]
    %407 = vrot.lane.b32.xlu0 %v399, 32
    %v408 = vpop.permute.xlu0 %407
    %409 = vrot.lane.b32.xlu0 %v400, 32
    %v410 = vpop.permute.xlu0 %409
    %411 = vrot.lane.b32.xlu0 %v401, 32
    %v412 = vpop.permute.xlu0 %411
    %413 = vrot.lane.b32.xlu0 %v402, 32
    %v414 = vpop.permute.xlu0 %413
    %419 = vst.msk [vmem:[#allocation2 + $0x18] sm:$0xff] %vm161, %v408
    %420 = vst.msk [vmem:[#allocation2 + $0x38] sm:$0xff] %vm161, %v410
    %421 = vst.msk [vmem:[#allocation2 + $0x58] sm:$0xff] %vm161, %v412
    %422 = vst.msk [vmem:[#allocation2 + $0x78] sm:$0xff] %vm161, %v414
    %v423 = vld [vmem:[%s1 + $0x6] sm:$0xff]
    %v424 = vld [vmem:[%s1 + $0xe] sm:$0xff]
    %v425 = vld [vmem:[%s1 + $0x1e] sm:$0xff]
    %v426 = vld [vmem:[%s1 + $0x26] sm:$0xff]
    %431 = vrot.lane.b32.xlu0 %v423, 64
    %v432 = vpop.permute.xlu0 %431
    %433 = vrot.lane.b32.xlu0 %v424, 64
    %v434 = vpop.permute.xlu0 %433
    %435 = vrot.lane.b32.xlu0 %v425, 64
    %v436 = vpop.permute.xlu0 %435
    %437 = vrot.lane.b32.xlu0 %v426, 64
    %v438 = vpop.permute.xlu0 %437
    %443 = vst.msk [vmem:[#allocation2 + $0x18] sm:$0xff] %vm185, %v432
    %444 = vst.msk [vmem:[#allocation2 + $0x38] sm:$0xff] %vm185, %v434
    %445 = vst.msk [vmem:[#allocation2 + $0x58] sm:$0xff] %vm185, %v436
    %446 = vst.msk [vmem:[#allocation2 + $0x78] sm:$0xff] %vm185, %v438
    %v451 = vrot.slane %v34, 1
    %v452 = vrot.slane %v35, 1
    %v453 = vsel %vm166, %v451, %v452
    %v454 = vrot.slane %v36, 1
    %v455 = vrot.slane %v37, 1
    %v456 = vsel %vm166, %v454, %v455
    %v461 = vmax.f32 %v34, %v453
    %v462 = vmax.f32 %v35, %v452
    %v463 = vmax.f32 %v36, %v456
    %v464 = vmax.f32 %v37, %v455
    %v465 = vrot.slane %v34, 2
    %v466 = vrot.slane %v35, 2
    %v467 = vsel %vm264, %v465, %v466
    %v468 = vrot.slane %v36, 2
    %v469 = vrot.slane %v37, 2
    %v470 = vsel %vm264, %v468, %v469
    %v475 = vmax.f32 %v461, %v467
    %v476 = vmax.f32 %v462, %v466
    %v477 = vmax.f32 %v463, %v470
    %v478 = vmax.f32 %v464, %v469
    %479 = vst.msk [vmem:[#allocation2 + $0x18] sm:$0x1] %vm201, 0.0
    %480 = vst.msk [vmem:[#allocation2 + $0x58] sm:$0x1] %vm201, 0.0
    %v485 = vrot.slane %v475, 7
    %v486 = vrot.slane %v476, 7
    %v487 = vsel %vm133, %v485, %v486
    %v488 = vrot.slane %v477, 7
    %v489 = vrot.slane %v478, 7
    %v490 = vsel %vm133, %v488, %v489
    %491 = vrot.lane.b32.xlu0 %v485, 96
    %v492 = vpop.permute.xlu0 %491
    %493 = vrot.lane.b32.xlu0 %v487, 96
    %v494 = vpop.permute.xlu0 %493
    %495 = vrot.lane.b32.xlu0 %v488, 96
    %v496 = vpop.permute.xlu0 %495
    %497 = vrot.lane.b32.xlu0 %v490, 96
    %v498 = vpop.permute.xlu0 %497
    %vm503 = vcmask 1048321
    %504 = vst.msk [vmem:[#allocation2 + $0x18] sm:$0xfe] %vm503, %v492
    %vm505 = vcmask 1047296
    %506 = vst.msk [vmem:[#allocation2 + $0x38] sm:$0x7f] %vm505, %v494
    %507 = vst.msk [vmem:[#allocation2 + $0x58] sm:$0xfe] %vm503, %v496
    %508 = vst.msk [vmem:[#allocation2 + $0x78] sm:$0x7f] %vm505, %v498
    %509 = vst.msk [vmem:[#allocation2 + $0x3f] sm:$0x1] %vm201, 0.0
    %510 = vst.msk [vmem:[#allocation2 + $0x7f] sm:$0x1] %vm201, 0.0
    %v511 = vld [vmem:[#allocation2] sm:$0xff]
    %v512 = vld [vmem:[#allocation2 + $0x8] sm:$0xff]
    %v513 = vld [vmem:[#allocation2 + $0x10] sm:$0xff]
    %v514 = vld [vmem:[#allocation2 + $0x18] sm:$0xff]
    %v515 = vld [vmem:[#allocation2 + $0x20] sm:$0xff]
    %v516 = vld [vmem:[#allocation2 + $0x28] sm:$0xff]
    %v517 = vld [vmem:[#allocation2 + $0x30] sm:$0xff]
    %v518 = vld [vmem:[#allocation2 + $0x38] sm:$0xff]
    %v519 = vld [vmem:[#allocation2 + $0x40] sm:$0xff]
    %v520 = vld [vmem:[#allocation2 + $0x48] sm:$0xff]
    %v521 = vld [vmem:[#allocation2 + $0x50] sm:$0xff]
    %v522 = vld [vmem:[#allocation2 + $0x58] sm:$0xff]
    %v523 = vld [vmem:[#allocation2 + $0x60] sm:$0xff]
    %v524 = vld [vmem:[#allocation2 + $0x68] sm:$0xff]
    %v525 = vld [vmem:[#allocation2 + $0x70] sm:$0xff]
    %v526 = vld [vmem:[#allocation2 + $0x78] sm:$0xff]
    %v527 = vpack.c.bf16 %v515, %v511
    %v528 = vpack.c.bf16 %v516, %v512
    %v529 = vpack.c.bf16 %v517, %v513
    %v530 = vpack.c.bf16 %v518, %v514
    %v531 = vpack.c.bf16 %v523, %v519
    %v532 = vpack.c.bf16 %v524, %v520
    %v533 = vpack.c.bf16 %v525, %v521
    %v534 = vpack.c.bf16 %v526, %v522
    %v535 = vld [vmem:[%s3] sm:$0xf]
    %v536 = vld [vmem:[%s3 + $0x4] sm:$0xf]
    %v537 = vld [vmem:[%s3 + $0x8] sm:$0xf]
    %v538 = vld [vmem:[%s3 + $0xc] sm:$0xf]
    %v539 = vld [vmem:[%s3 + $0x10] sm:$0xf]
    %v540 = vld [vmem:[%s3 + $0x14] sm:$0xf]
    %v541 = vld [vmem:[%s3 + $0x18] sm:$0xf]
    %v542 = vld [vmem:[%s3 + $0x1c] sm:$0xf]
    %v543 = vld [vmem:[%s3 + $0x20] sm:$0xf]
    %v544 = vld [vmem:[%s3 + $0x24] sm:$0xf]
    %v545 = vld [vmem:[%s3 + $0x28] sm:$0xf]
    %v546 = vld [vmem:[%s3 + $0x2c] sm:$0xf]
    %v547 = vld [vmem:[%s3 + $0x30] sm:$0xf]
    %v548 = vld [vmem:[%s3 + $0x34] sm:$0xf]
    %v549 = vld [vmem:[%s3 + $0x38] sm:$0xf]
    %v550 = vld [vmem:[%s3 + $0x3c] sm:$0xf]
    %v551 = vld [vmem:[%s3 + $0x40] sm:$0xf]
    %v552 = vld [vmem:[%s3 + $0x44] sm:$0xf]
    %v553 = vld [vmem:[%s3 + $0x48] sm:$0xf]
    %v554 = vld [vmem:[%s3 + $0x4c] sm:$0xf]
    %v555 = vld [vmem:[%s3 + $0x50] sm:$0xf]
    %v556 = vld [vmem:[%s3 + $0x54] sm:$0xf]
    %v557 = vld [vmem:[%s3 + $0x58] sm:$0xf]
    %v558 = vld [vmem:[%s3 + $0x5c] sm:$0xf]
    %v559 = vld [vmem:[%s3 + $0x60] sm:$0xf]
    %v560 = vld [vmem:[%s3 + $0x64] sm:$0xf]
    %v561 = vld [vmem:[%s3 + $0x68] sm:$0xf]
    %v562 = vld [vmem:[%s3 + $0x6c] sm:$0xf]
    %v563 = vld [vmem:[%s3 + $0x70] sm:$0xf]
    %v564 = vld [vmem:[%s3 + $0x74] sm:$0xf]
    %v565 = vld [vmem:[%s3 + $0x78] sm:$0xf]
    %v566 = vld [vmem:[%s3 + $0x7c] sm:$0xf]
    %v567 = vld [vmem:[%s3 + $0x80] sm:$0xf]
    %v568 = vld [vmem:[%s3 + $0x84] sm:$0xf]
    %v569 = vld [vmem:[%s3 + $0x88] sm:$0xf]
    %v570 = vld [vmem:[%s3 + $0x8c] sm:$0xf]
    %v571 = vld [vmem:[%s3 + $0x90] sm:$0xf]
    %v572 = vld [vmem:[%s3 + $0x94] sm:$0xf]
    %v573 = vld [vmem:[%s3 + $0x98] sm:$0xf]
    %v574 = vld [vmem:[%s3 + $0x9c] sm:$0xf]
    %v575 = vld [vmem:[%s3 + $0xa0] sm:$0xf]
    %v576 = vld [vmem:[%s3 + $0xa4] sm:$0xf]
    %v577 = vld [vmem:[%s3 + $0xa8] sm:$0xf]
    %v578 = vld [vmem:[%s3 + $0xac] sm:$0xf]
    %v579 = vld [vmem:[%s3 + $0xb0] sm:$0xf]
    %v580 = vld [vmem:[%s3 + $0xb4] sm:$0xf]
    %v581 = vld [vmem:[%s3 + $0xb8] sm:$0xf]
    %v582 = vld [vmem:[%s3 + $0xbc] sm:$0xf]
    %v583 = vld [vmem:[%s3 + $0xc0] sm:$0xf]
    %v584 = vld [vmem:[%s3 + $0xc4] sm:$0xf]
    %v585 = vld [vmem:[%s3 + $0xc8] sm:$0xf]
    %v586 = vld [vmem:[%s3 + $0xcc] sm:$0xf]
    %v587 = vld [vmem:[%s3 + $0xd0] sm:$0xf]
    %v588 = vld [vmem:[%s3 + $0xd4] sm:$0xf]
    %v589 = vld [vmem:[%s3 + $0xd8] sm:$0xf]
    %v590 = vld [vmem:[%s3 + $0xdc] sm:$0xf]
    %v591 = vld [vmem:[%s3 + $0xe0] sm:$0xf]
    %v592 = vld [vmem:[%s3 + $0xe4] sm:$0xf]
    %v593 = vld [vmem:[%s3 + $0xe8] sm:$0xf]
    %v594 = vld [vmem:[%s3 + $0xec] sm:$0xf]
    %v595 = vld [vmem:[%s3 + $0xf0] sm:$0xf]
    %v596 = vld [vmem:[%s3 + $0xf4] sm:$0xf]
    %v597 = vld [vmem:[%s3 + $0xf8] sm:$0xf]
    %v598 = vld [vmem:[%s3 + $0xfc] sm:$0xf]
    %v663 = vunpack.c.l.b16 %v535
    %v664 = vunpack.c.l.b16 %v536
    %v665 = vunpack.c.l.b16 %v537
    %v666 = vunpack.c.l.b16 %v538
    %v667 = vunpack.c.l.b16 %v539
    %v668 = vunpack.c.l.b16 %v540
    %v669 = vunpack.c.l.b16 %v541
    %v670 = vunpack.c.l.b16 %v542
    %v671 = vunpack.c.l.b16 %v543
    %v672 = vunpack.c.l.b16 %v544
    %v673 = vunpack.c.l.b16 %v545
    %v674 = vunpack.c.l.b16 %v546
    %v675 = vunpack.c.l.b16 %v547
    %v676 = vunpack.c.l.b16 %v548
    %v677 = vunpack.c.l.b16 %v549
    %v678 = vunpack.c.l.b16 %v550
    %v679 = vunpack.c.l.b16 %v551
    %v680 = vunpack.c.l.b16 %v552
    %v681 = vunpack.c.l.b16 %v553
    %v682 = vunpack.c.l.b16 %v554
    %v683 = vunpack.c.l.b16 %v555
    %v684 = vunpack.c.l.b16 %v556
    %v685 = vunpack.c.l.b16 %v557
    %v686 = vunpack.c.l.b16 %v558
    %v687 = vunpack.c.l.b16 %v559
    %v688 = vunpack.c.l.b16 %v560
    %v689 = vunpack.c.l.b16 %v561
    %v690 = vunpack.c.l.b16 %v562
    %v691 = vunpack.c.l.b16 %v563
    %v692 = vunpack.c.l.b16 %v564
    %v693 = vunpack.c.l.b16 %v565
    %v694 = vunpack.c.l.b16 %v566
    %v695 = vunpack.c.l.b16 %v567
    %v696 = vunpack.c.l.b16 %v568
    %v697 = vunpack.c.l.b16 %v569
    %v698 = vunpack.c.l.b16 %v570
    %v699 = vunpack.c.l.b16 %v571
    %v700 = vunpack.c.l.b16 %v572
    %v701 = vunpack.c.l.b16 %v573
    %v702 = vunpack.c.l.b16 %v574
    %v703 = vunpack.c.l.b16 %v575
    %v704 = vunpack.c.l.b16 %v576
    %v705 = vunpack.c.l.b16 %v577
    %v706 = vunpack.c.l.b16 %v578
    %v707 = vunpack.c.l.b16 %v579
    %v708 = vunpack.c.l.b16 %v580
    %v709 = vunpack.c.l.b16 %v581
    %v710 = vunpack.c.l.b16 %v582
    %v711 = vunpack.c.l.b16 %v583
    %v712 = vunpack.c.l.b16 %v584
    %v713 = vunpack.c.l.b16 %v585
    %v714 = vunpack.c.l.b16 %v586
    %v715 = vunpack.c.l.b16 %v587
    %v716 = vunpack.c.l.b16 %v588
    %v717 = vunpack.c.l.b16 %v589
    %v718 = vunpack.c.l.b16 %v590
    %v719 = vunpack.c.l.b16 %v591
    %v720 = vunpack.c.l.b16 %v592
    %v721 = vunpack.c.l.b16 %v593
    %v722 = vunpack.c.l.b16 %v594
    %v723 = vunpack.c.l.b16 %v595
    %v724 = vunpack.c.l.b16 %v596
    %v725 = vunpack.c.l.b16 %v597
    %v726 = vunpack.c.l.b16 %v598
    %v727 = vpack.c.b16 %v664, %v663
    %v728 = vpack.c.b16 %v666, %v665
    %v729 = vpack.c.b16 %v668, %v667
    %v730 = vpack.c.b16 %v670, %v669
    %v731 = vpack.c.b16 %v672, %v671
    %v732 = vpack.c.b16 %v674, %v673
    %v733 = vpack.c.b16 %v676, %v675
    %v734 = vpack.c.b16 %v678, %v677
    %v735 = vpack.c.b16 %v680, %v679
    %v736 = vpack.c.b16 %v682, %v681
    %v737 = vpack.c.b16 %v684, %v683
    %v738 = vpack.c.b16 %v686, %v685
    %v739 = vpack.c.b16 %v688, %v687
    %v740 = vpack.c.b16 %v690, %v689
    %v741 = vpack.c.b16 %v692, %v691
    %v742 = vpack.c.b16 %v694, %v693
    %v743 = vpack.c.b16 %v696, %v695
    %v744 = vpack.c.b16 %v698, %v697
    %v745 = vpack.c.b16 %v700, %v699
    %v746 = vpack.c.b16 %v702, %v701
    %v747 = vpack.c.b16 %v704, %v703
    %v748 = vpack.c.b16 %v706, %v705
    %v749 = vpack.c.b16 %v708, %v707
    %v750 = vpack.c.b16 %v710, %v709
    %v751 = vpack.c.b16 %v712, %v711
    %v752 = vpack.c.b16 %v714, %v713
    %v753 = vpack.c.b16 %v716, %v715
    %v754 = vpack.c.b16 %v718, %v717
    %v755 = vpack.c.b16 %v720, %v719
    %v756 = vpack.c.b16 %v722, %v721
    %v757 = vpack.c.b16 %v724, %v723
    %v758 = vpack.c.b16 %v726, %v725
    %791 = vmatprep.subr.bf16.mxu0 0
    %792 = vmatpush1.bf16.msra.mxu0 %v734
    %793 = vmatprep.subr.bf16.mxu0 0
    %794 = vmatpush1.bf16.msra.mxu0 %v733
    %795 = vmatprep.subr.bf16.mxu0 0
    %796 = vmatpush1.bf16.msra.mxu0 %v732
    %797 = vmatprep.subr.bf16.mxu0 0
    %798 = vmatpush1.bf16.msra.mxu0 %v731
    %799 = vmatprep.subr.bf16.mxu0 0
    %800 = vmatpush1.bf16.msra.mxu0 %v730
    %801 = vmatprep.subr.bf16.mxu0 0
    %802 = vmatpush1.bf16.msra.mxu0 %v729
    %803 = vmatprep.subr.bf16.mxu0 0
    %804 = vmatpush1.bf16.msra.mxu0 %v728
    %805 = vmatprep.subr.bf16.mxu0 0
    %806 = vmatpush1.bf16.msra.mxu0 %v727
    %807 = vmatprep.subr.bf16.mxu0 0
    %808 = vmatpush2.bf16.msra.mxu0 %v742
    %809 = vmatprep.subr.bf16.mxu0 0
    %810 = vmatpush2.bf16.msra.mxu0 %v741
    %811 = vmatprep.subr.bf16.mxu0 0
    %812 = vmatpush2.bf16.msra.mxu0 %v740
    %813 = vmatprep.subr.bf16.mxu0 0
    %814 = vmatpush2.bf16.msra.mxu0 %v739
    %815 = vmatprep.subr.bf16.mxu0 0
    %816 = vmatpush2.bf16.msra.mxu0 %v738
    %817 = vmatprep.subr.bf16.mxu0 0
    %818 = vmatpush2.bf16.msra.mxu0 %v737
    %819 = vmatprep.subr.bf16.mxu0 0
    %820 = vmatpush2.bf16.msra.mxu0 %v736
    %821 = vmatprep.subr.bf16.mxu0 0
    %822 = vmatpush2.bf16.msra.mxu0 %v735
    %823 = vmatprep.mubr.bf16.mxu0 %v528
    %824 = vmatmul.mubr.bf16.gmra.mxu0 %v527
    %v825 = vpop.f32.mrf.mxu0
    %v826 = vadd.f32 0.0, %v825
    %v827 = vpop.f32.mrf.mxu0
    %v828 = vpop.f32.mrf.mxu0
    %v829 = vadd.f32 0.0, %v828
    %v830 = vpop.f32.mrf.mxu0
    %831 = vmatprep.mubr.bf16.mxu0 %v532
    %832 = vmatmul.mubr.bf16.gmra.mxu0 %v531
    %v833 = vpop.f32.mrf.mxu0
    %v834 = vadd.f32 0.0, %v833
    %v835 = vpop.f32.mrf.mxu0
    %v836 = vpop.f32.mrf.mxu0
    %v837 = vadd.f32 0.0, %v836
    %v838 = vpop.f32.mrf.mxu0
    %839 = vdwg.mxu0
    %840 = vmatprep.subr.bf16.mxu0 0
    %841 = vmatpush1.bf16.msra.mxu0 %v750
    %842 = vmatprep.subr.bf16.mxu0 0
    %843 = vmatpush1.bf16.msra.mxu0 %v749
    %844 = vmatprep.subr.bf16.mxu0 0
    %845 = vmatpush1.bf16.msra.mxu0 %v748
    %846 = vmatprep.subr.bf16.mxu0 0
    %847 = vmatpush1.bf16.msra.mxu0 %v747
    %848 = vmatprep.subr.bf16.mxu0 0
    %849 = vmatpush1.bf16.msra.mxu0 %v746
    %850 = vmatprep.subr.bf16.mxu0 0
    %851 = vmatpush1.bf16.msra.mxu0 %v745
    %852 = vmatprep.subr.bf16.mxu0 0
    %853 = vmatpush1.bf16.msra.mxu0 %v744
    %854 = vmatprep.subr.bf16.mxu0 0
    %855 = vmatpush1.bf16.msra.mxu0 %v743
    %856 = vmatprep.subr.bf16.mxu0 0
    %857 = vmatpush2.bf16.msra.mxu0 %v758
    %858 = vmatprep.subr.bf16.mxu0 0
    %859 = vmatpush2.bf16.msra.mxu0 %v757
    %860 = vmatprep.subr.bf16.mxu0 0
    %861 = vmatpush2.bf16.msra.mxu0 %v756
    %862 = vmatprep.subr.bf16.mxu0 0
    %863 = vmatpush2.bf16.msra.mxu0 %v755
    %864 = vmatprep.subr.bf16.mxu0 0
    %865 = vmatpush2.bf16.msra.mxu0 %v754
    %866 = vmatprep.subr.bf16.mxu0 0
    %867 = vmatpush2.bf16.msra.mxu0 %v753
    %868 = vmatprep.subr.bf16.mxu0 0
    %869 = vmatpush2.bf16.msra.mxu0 %v752
    %870 = vmatprep.subr.bf16.mxu0 0
    %871 = vmatpush2.bf16.msra.mxu0 %v751
    %872 = vmatprep.mubr.bf16.mxu0 %v530
    %873 = vmatmul.mubr.bf16.gmra.mxu0 %v529
    %v874 = vpop.f32.mrf.mxu0
    %v875 = vadd.f32 %v826, %v874
    %v876 = vpop.f32.mrf.mxu0
    %v877 = vpop.f32.mrf.mxu0
    %v878 = vadd.f32 %v829, %v877
    %v879 = vpop.f32.mrf.mxu0
    %880 = vmatprep.mubr.bf16.mxu0 %v534
    %881 = vmatmul.mubr.bf16.gmra.mxu0 %v533
    %v882 = vpop.f32.mrf.mxu0
    %v883 = vadd.f32 %v834, %v882
    %v884 = vpop.f32.mrf.mxu0
    %v885 = vpop.f32.mrf.mxu0
    %v886 = vadd.f32 %v837, %v885
    %v887 = vpop.f32.mrf.mxu0
    %888 = vdwg.mxu0
    %v889 = vlaneseq
    %v890 = vshrl.u32 %v889, 7
    %v891 = vsub.s32 1, %v890
    %v892 = vrot.slane %v38, %v891
    %v893 = vadd.f32 %v875, %v892
    %v894 = vadd.f32 %v878, %v892
    %v895 = vadd.f32 %v883, %v892
    %v896 = vadd.f32 %v886, %v892
    %v897 = vmax.f32 %v893, 0.0
    %v898 = vmax.f32 %v894, 0.0
    %v899 = vmax.f32 %v895, 0.0
    %v900 = vmax.f32 %v896, 0.0
    %v901 = vadd.f32 %v897, %v898
    %v902 = vrot.slane %v901, 4
    %v903 = vadd.f32 %v901, %v902
    %v904 = vrot.slane %v903, 2
    %v905 = vadd.f32 %v903, %v904
    %v906 = vrot.slane %v905, 1
    %v907 = vadd.f32 %v905, %v906
    %v908 = vadd.f32 %v899, %v900
    %v909 = vrot.slane %v908, 4
    %v910 = vadd.f32 %v908, %v909
    %v911 = vrot.slane %v910, 2
    %v912 = vadd.f32 %v910, %v911
    %v913 = vrot.slane %v912, 1
    %v914 = vadd.f32 %v912, %v913
    %v915 = vrcp.pop 16.0
    %v916 = vmul.f32 %v907, %v915
    %v917 = vmul.f32 %v914, %v915
    %v918 = vld [vmem:[%s4] sm:$0xff]
    %v919 = vld [vmem:[%s4 + $0x8] sm:$0xff]
    %v920 = vld [vmem:[%s4 + $0x10] sm:$0xff]
    %v921 = vld [vmem:[%s4 + $0x18] sm:$0xff]
    %v922 = vld [vmem:[%s4 + $0x20] sm:$0xff]
    %v923 = vld [vmem:[%s4 + $0x28] sm:$0xff]
    %v924 = vld [vmem:[%s4 + $0x30] sm:$0xff]
    %v925 = vld [vmem:[%s4 + $0x38] sm:$0xff]
    %v926 = vld [vmem:[%s4 + $0x40] sm:$0xff]
    %v927 = vld [vmem:[%s4 + $0x48] sm:$0xff]
    %v928 = vld [vmem:[%s4 + $0x50] sm:$0xff]
    %v929 = vld [vmem:[%s4 + $0x58] sm:$0xff]
    %v930 = vld [vmem:[%s4 + $0x60] sm:$0xff]
    %v931 = vld [vmem:[%s4 + $0x68] sm:$0xff]
    %v932 = vld [vmem:[%s4 + $0x70] sm:$0xff]
    %v933 = vld [vmem:[%s4 + $0x78] sm:$0xff]
    %vm936 = vcmask 1041409
    %v937 = vsel %vm936, %v917, %v916
    %939 = vmatprep.subr.mxu0 0.0
    %940 = vmatpush1.msra.mxu0 %v933
    %941 = vmatprep.subr.mxu0 0.0
    %942 = vmatpush1.msra.mxu0 %v932
    %943 = vmatprep.subr.mxu0 0.0
    %944 = vmatpush1.msra.mxu0 %v931
    %945 = vmatprep.subr.mxu0 0.0
    %946 = vmatpush1.msra.mxu0 %v930
    %947 = vmatprep.subr.mxu0 0.0
    %948 = vmatpush1.msra.mxu0 %v929
    %949 = vmatprep.subr.mxu0 0.0
    %950 = vmatpush1.msra.mxu0 %v928
    %951 = vmatprep.subr.mxu0 0.0
    %952 = vmatpush1.msra.mxu0 %v927
    %953 = vmatprep.subr.mxu0 0.0
    %954 = vmatpush1.msra.mxu0 %v926
    %955 = vmatprep.subr.mxu0 0.0
    %956 = vmatpush1.msra.mxu0 %v925
    %957 = vmatprep.subr.mxu0 0.0
    %958 = vmatpush1.msra.mxu0 %v924
    %959 = vmatprep.subr.mxu0 0.0
    %960 = vmatpush1.msra.mxu0 %v923
    %961 = vmatprep.subr.mxu0 0.0
    %962 = vmatpush1.msra.mxu0 %v922
    %963 = vmatprep.subr.mxu0 0.0
    %964 = vmatpush1.msra.mxu0 %v921
    %965 = vmatprep.subr.mxu0 0.0
    %966 = vmatpush1.msra.mxu0 %v920
    %967 = vmatprep.subr.mxu0 0.0
    %968 = vmatpush1.msra.mxu0 %v919
    %969 = vmatprep.subr.mxu0 0.0
    %970 = vmatpush1.msra.mxu0 %v918
    %971 = vmatprep.subr.mxu0 0.0
    %972 = vmatpush2.msra.mxu0 0.0
    %973 = vmatprep.subr.mxu0 0.0
    %974 = vmatpush2.msra.mxu0 0.0
    %975 = vmatprep.subr.mxu0 0.0
    %976 = vmatpush2.msra.mxu0 0.0
    %977 = vmatprep.subr.mxu0 0.0
    %978 = vmatpush2.msra.mxu0 0.0
    %979 = vmatprep.subr.mxu0 0.0
    %980 = vmatpush2.msra.mxu0 0.0
    %981 = vmatprep.subr.mxu0 0.0
    %982 = vmatpush2.msra.mxu0 0.0
    %983 = vmatprep.subr.mxu0 0.0
    %984 = vmatpush2.msra.mxu0 0.0
    %985 = vmatprep.subr.mxu0 0.0
    %986 = vmatpush2.msra.mxu0 0.0
    %987 = vmatprep.subr.mxu0 0.0
    %988 = vmatpush2.msra.mxu0 0.0
    %989 = vmatprep.subr.mxu0 0.0
    %990 = vmatpush2.msra.mxu0 0.0
    %991 = vmatprep.subr.mxu0 0.0
    %992 = vmatpush2.msra.mxu0 0.0
    %993 = vmatprep.subr.mxu0 0.0
    %994 = vmatpush2.msra.mxu0 0.0
    %995 = vmatprep.subr.mxu0 0.0
    %996 = vmatpush2.msra.mxu0 0.0
    %997 = vmatprep.subr.mxu0 0.0
    %998 = vmatpush2.msra.mxu0 0.0
    %999 = vmatprep.subr.mxu0 0.0
    %1000 = vmatpush2.msra.mxu0 0.0
    %1001 = vmatprep.subr.mxu0 0.0
    %1002 = vmatpush2.msra.mxu0 0.0
    %1003 = vmatprep.mubr.f32.mxu0 0.0
    %1004 = vmatmul.mubr.f32.gmra.mxu0 %v937
    %v1005 = vpop.f32.mrf.mxu0
    %v1006 = vadd.f32 0.0, %v1005
    %v1007 = vpop.f32.mrf.mxu0
    %1008 = vdwg.mxu0
    %v1009 = vmax.f32 %v1006, 0.0
    %v1010 = vld [vmem:[%s5] sm:$0x3]
    %vm1011 = vcmask 15360
    %v1013 = vsel %vm1011, %v1009, 0
    %v1016 = vsel %vm236, %v1010, 0
    %1018 = vmatprep.subr.mxu0 0.0
    %1019 = vmatpush1.msra.mxu0 0.0
    %1020 = vmatprep.subr.mxu0 0.0
    %1021 = vmatpush1.msra.mxu0 0.0
    %1022 = vmatprep.subr.mxu0 0.0
    %1023 = vmatpush1.msra.mxu0 0.0
    %1024 = vmatprep.subr.mxu0 0.0
    %1025 = vmatpush1.msra.mxu0 0.0
    %1026 = vmatprep.subr.mxu0 0.0
    %1027 = vmatpush1.msra.mxu0 0.0
    %1028 = vmatprep.subr.mxu0 0.0
    %1029 = vmatpush1.msra.mxu0 0.0
    %1030 = vmatprep.subr.mxu0 0.0
    %1031 = vmatpush1.msra.mxu0 0.0
    %1032 = vmatprep.subr.mxu0 0.0
    %1033 = vmatpush1.msra.mxu0 0.0
    %1034 = vmatprep.subr.mxu0 0.0
    %1035 = vmatpush1.msra.mxu0 0.0
    %1036 = vmatprep.subr.mxu0 0.0
    %1037 = vmatpush1.msra.mxu0 0.0
    %1038 = vmatprep.subr.mxu0 0.0
    %1039 = vmatpush1.msra.mxu0 0.0
    %1040 = vmatprep.subr.mxu0 0.0
    %1041 = vmatpush1.msra.mxu0 0.0
    %1042 = vmatprep.subr.mxu0 0.0
    %1043 = vmatpush1.msra.mxu0 0.0
    %1044 = vmatprep.subr.mxu0 0.0
    %1045 = vmatpush1.msra.mxu0 0.0
    %1046 = vmatprep.subr.mxu0 0.0
    %1047 = vmatpush1.msra.mxu0 0.0
    %1048 = vmatprep.subr.mxu0 0.0
    %1049 = vmatpush1.msra.mxu0 %v1016
    %1050 = vmatprep.subr.mxu0 0.0
    %1051 = vmatpush2.msra.mxu0 0.0
    %1052 = vmatprep.subr.mxu0 0.0
    %1053 = vmatpush2.msra.mxu0 0.0
    %1054 = vmatprep.subr.mxu0 0.0
    %1055 = vmatpush2.msra.mxu0 0.0
    %1056 = vmatprep.subr.mxu0 0.0
    %1057 = vmatpush2.msra.mxu0 0.0
    %1058 = vmatprep.subr.mxu0 0.0
    %1059 = vmatpush2.msra.mxu0 0.0
    %1060 = vmatprep.subr.mxu0 0.0
    %1061 = vmatpush2.msra.mxu0 0.0
    %1062 = vmatprep.subr.mxu0 0.0
    %1063 = vmatpush2.msra.mxu0 0.0
    %1064 = vmatprep.subr.mxu0 0.0
    %1065 = vmatpush2.msra.mxu0 0.0
    %1066 = vmatprep.subr.mxu0 0.0
    %1067 = vmatpush2.msra.mxu0 0.0
    %1068 = vmatprep.subr.mxu0 0.0
    %1069 = vmatpush2.msra.mxu0 0.0
    %1070 = vmatprep.subr.mxu0 0.0
    %1071 = vmatpush2.msra.mxu0 0.0
    %1072 = vmatprep.subr.mxu0 0.0
    %1073 = vmatpush2.msra.mxu0 0.0
    %1074 = vmatprep.subr.mxu0 0.0
    %1075 = vmatpush2.msra.mxu0 0.0
    %1076 = vmatprep.subr.mxu0 0.0
    %1077 = vmatpush2.msra.mxu0 0.0
    %1078 = vmatprep.subr.mxu0 0.0
    %1079 = vmatpush2.msra.mxu0 0.0
    %1080 = vmatprep.subr.mxu0 0.0
    %1081 = vmatpush2.msra.mxu0 0.0
    %1082 = vmatprep.mubr.f32.mxu0 0.0
    %1083 = vmatmul.mubr.f32.gmra.mxu0 %v1013
    %v1084 = vpop.f32.mrf.mxu0
    %v1085 = vadd.f32 0.0, %v1084
    %v1086 = vpop.f32.mrf.mxu0
    %1087 = vdwg.mxu0
    %v1088 = vsub.f32 0.0, %v1085
    %v1089 = vmul.f32 %v1088, 1.442695
    %v1090 = vpow.pop %v1089
    %v1091 = vadd.f32 %v1090, 1.0
    %v1092 = vrcp.pop %v1091
    %v1095 = vunpack.c.l.s4 1966171168
    %v1096 = vunpack.c.0.s8 %v1095
    %v1097 = vlaneseq
    %v1098 = vshrl.u32 %v1097, 7
    %v1099 = vsub.s32 %v1096, %v1098
    %v1100 = vrot.slane %v1092, %v1099
    %v1101 = vcombine.high %v1100, %v1100
    %v1103 = vunpack.c.l.s4 1966171168
    %v1104 = vunpack.c.0.s8 %v1103
    %v1105 = vlaneseq
    %v1106 = vshrl.u32 %v1105, 7
    %v1107 = vsub.s32 %v1104, %v1106
    %v1108 = vrot.slane %v1100, %v1107
    %v1110 = vunpack.c.l.s4 1966171168
    %v1111 = vunpack.c.0.s8 %v1110
    %v1112 = vlaneseq
    %v1113 = vshrl.u32 %v1112, 7
    %v1114 = vsub.s32 %v1111, %v1113
    %v1115 = vrot.slane %v1101, %v1114
    %v1116 = vlaneseq
    %v1117 = vshrl.u32 %v1116, 7
    %v1118 = vsub.s32 0, %v1117
    %v1119 = vrot.slane %v1108, %v1118
    %v1120 = vlaneseq
    %v1121 = vshrl.u32 %v1120, 7
    %v1122 = vsub.s32 0, %v1121
    %v1123 = vrot.slane %v1115, %v1122
    %v1126 = vmul.f32 %v897, %v1119
    %v1127 = vmul.f32 %v898, %v1119
    %v1128 = vmul.f32 %v899, %v1123
    %v1129 = vmul.f32 %v900, %v1123
    %v1130 = vld [vmem:[%s6] sm:$0xff]
    %v1131 = vld [vmem:[%s6 + $0x8] sm:$0xff]
    %v1132 = vld [vmem:[%s6 + $0x10] sm:$0xff]
    %v1133 = vld [vmem:[%s6 + $0x18] sm:$0xff]
    %v1134 = vld [vmem:[%s6 + $0x20] sm:$0xff]
    %v1135 = vld [vmem:[%s6 + $0x28] sm:$0xff]
    %v1136 = vld [vmem:[%s6 + $0x30] sm:$0xff]
    %v1137 = vld [vmem:[%s6 + $0x38] sm:$0xff]
    %v1138 = vld [vmem:[%s6 + $0x40] sm:$0xff]
    %v1139 = vld [vmem:[%s6 + $0x48] sm:$0xff]
    %v1140 = vld [vmem:[%s6 + $0x50] sm:$0xff]
    %v1141 = vld [vmem:[%s6 + $0x58] sm:$0xff]
    %v1142 = vld [vmem:[%s6 + $0x60] sm:$0xff]
    %v1143 = vld [vmem:[%s6 + $0x68] sm:$0xff]
    %v1144 = vld [vmem:[%s6 + $0x70] sm:$0xff]
    %v1145 = vld [vmem:[%s6 + $0x78] sm:$0xff]
    %1146 = vmatprep.subr.mxu0 0.0
    %1147 = vmatpush1.msra.mxu0 %v1145
    %1148 = vmatprep.subr.mxu0 0.0
    %1149 = vmatpush1.msra.mxu0 %v1144
    %1150 = vmatprep.subr.mxu0 0.0
    %1151 = vmatpush1.msra.mxu0 %v1143
    %1152 = vmatprep.subr.mxu0 0.0
    %1153 = vmatpush1.msra.mxu0 %v1142
    %1154 = vmatprep.subr.mxu0 0.0
    %1155 = vmatpush1.msra.mxu0 %v1141
    %1156 = vmatprep.subr.mxu0 0.0
    %1157 = vmatpush1.msra.mxu0 %v1140
    %1158 = vmatprep.subr.mxu0 0.0
    %1159 = vmatpush1.msra.mxu0 %v1139
    %1160 = vmatprep.subr.mxu0 0.0
    %1161 = vmatpush1.msra.mxu0 %v1138
    %1162 = vmatprep.subr.mxu0 0.0
    %1163 = vmatpush1.msra.mxu0 %v1137
    %1164 = vmatprep.subr.mxu0 0.0
    %1165 = vmatpush1.msra.mxu0 %v1136
    %1166 = vmatprep.subr.mxu0 0.0
    %1167 = vmatpush1.msra.mxu0 %v1135
    %1168 = vmatprep.subr.mxu0 0.0
    %1169 = vmatpush1.msra.mxu0 %v1134
    %1170 = vmatprep.subr.mxu0 0.0
    %1171 = vmatpush1.msra.mxu0 %v1133
    %1172 = vmatprep.subr.mxu0 0.0
    %1173 = vmatpush1.msra.mxu0 %v1132
    %1174 = vmatprep.subr.mxu0 0.0
    %1175 = vmatpush1.msra.mxu0 %v1131
    %1176 = vmatprep.subr.mxu0 0.0
    %1177 = vmatpush1.msra.mxu0 %v1130
    %1178 = vmatprep.subr.mxu0 0.0
    %1179 = vmatpush2.msra.mxu0 0.0
    %1180 = vmatprep.subr.mxu0 0.0
    %1181 = vmatpush2.msra.mxu0 0.0
    %1182 = vmatprep.subr.mxu0 0.0
    %1183 = vmatpush2.msra.mxu0 0.0
    %1184 = vmatprep.subr.mxu0 0.0
    %1185 = vmatpush2.msra.mxu0 0.0
    %1186 = vmatprep.subr.mxu0 0.0
    %1187 = vmatpush2.msra.mxu0 0.0
    %1188 = vmatprep.subr.mxu0 0.0
    %1189 = vmatpush2.msra.mxu0 0.0
    %1190 = vmatprep.subr.mxu0 0.0
    %1191 = vmatpush2.msra.mxu0 0.0
    %1192 = vmatprep.subr.mxu0 0.0
    %1193 = vmatpush2.msra.mxu0 0.0
    %1194 = vmatprep.subr.mxu0 0.0
    %1195 = vmatpush2.msra.mxu0 0.0
    %1196 = vmatprep.subr.mxu0 0.0
    %1197 = vmatpush2.msra.mxu0 0.0
    %1198 = vmatprep.subr.mxu0 0.0
    %1199 = vmatpush2.msra.mxu0 0.0
    %1200 = vmatprep.subr.mxu0 0.0
    %1201 = vmatpush2.msra.mxu0 0.0
    %1202 = vmatprep.subr.mxu0 0.0
    %1203 = vmatpush2.msra.mxu0 0.0
    %1204 = vmatprep.subr.mxu0 0.0
    %1205 = vmatpush2.msra.mxu0 0.0
    %1206 = vmatprep.subr.mxu0 0.0
    %1207 = vmatpush2.msra.mxu0 0.0
    %1208 = vmatprep.subr.mxu0 0.0
    %1209 = vmatpush2.msra.mxu0 0.0
    %1210 = vmatprep.mubr.f32.mxu0 0.0
    %1211 = vmatmul.mubr.f32.gmra.mxu0 %v1126
    %v1212 = vpop.f32.mrf.mxu0
    %v1213 = vadd.f32 0.0, %v1212
    %v1214 = vpop.f32.mrf.mxu0
    %1215 = vmatprep.mubr.f32.mxu0 0.0
    %1216 = vmatmul.mubr.f32.gmra.mxu0 %v1127
    %v1217 = vpop.f32.mrf.mxu0
    %v1218 = vadd.f32 0.0, %v1217
    %v1219 = vpop.f32.mrf.mxu0
    %1220 = vmatprep.mubr.f32.mxu0 0.0
    %1221 = vmatmul.mubr.f32.gmra.mxu0 %v1128
    %v1222 = vpop.f32.mrf.mxu0
    %v1223 = vadd.f32 0.0, %v1222
    %v1224 = vpop.f32.mrf.mxu0
    %1225 = vmatprep.mubr.f32.mxu0 0.0
    %1226 = vmatmul.mubr.f32.gmra.mxu0 %v1129
    %v1227 = vpop.f32.mrf.mxu0
    %v1228 = vadd.f32 0.0, %v1227
    %v1229 = vpop.f32.mrf.mxu0
    %1230 = vdwg.mxu0
    %v1231 = vlaneseq
    %v1232 = vshrl.u32 %v1231, 7
    %v1233 = vsub.s32 2, %v1232
    %v1234 = vrot.slane %v38, %v1233
    %v1235 = vadd.f32 %v1213, %v1234
    %v1236 = vadd.f32 %v1218, %v1234
    %v1237 = vadd.f32 %v1223, %v1234
    %v1238 = vadd.f32 %v1228, %v1234
    %vm1239 = vcmask 130048
    %v1240 = vsel %vm1239, %v1235, 0.0
    %v1241 = vsel %vm1239, %v1236, 0.0
    %v1242 = vadd.f32 %v1240, %v1241
    %v1243 = vrot.slane %v1242, 4
    %v1244 = vadd.f32 %v1242, %v1243
    %v1245 = vrot.slane %v1244, 2
    %v1246 = vadd.f32 %v1244, %v1245
    %v1247 = vrot.slane %v1246, 1
    %v1248 = vadd.f32 %v1246, %v1247
    %v1249 = vsel %vm1239, %v1237, 0.0
    %v1250 = vsel %vm1239, %v1238, 0.0
    %v1251 = vadd.f32 %v1249, %v1250
    %v1252 = vrot.slane %v1251, 4
    %v1253 = vadd.f32 %v1251, %v1252
    %v1254 = vrot.slane %v1253, 2
    %v1255 = vadd.f32 %v1253, %v1254
    %v1256 = vrot.slane %v1255, 1
    %v1257 = vadd.f32 %v1255, %v1256
    %v1258 = vmul.f32 %v1248, %v915
    %v1259 = vmul.f32 %v1257, %v915
    %v1260 = vsel %vm1239, %v1258, 0.0
    %v1261 = vsel %vm1239, %v1259, 0.0
    %v1262 = vadd.f32 %v1260, %v1261
    %v1263 = vrcp.pop 2.0
    %v1264 = vmul.f32 %v1262, %v1263
    %v1265 = vsub.f32 %v1235, %v1264
    %v1266 = vsub.f32 %v1236, %v1264
    %v1267 = vsub.f32 %v1237, %v1264
    %v1268 = vsub.f32 %v1238, %v1264
    %v1269 = vmul.f32 %v1265, %v1265
    %v1270 = vmul.f32 %v1266, %v1266
    %v1271 = vmul.f32 %v1267, %v1267
    %v1272 = vmul.f32 %v1268, %v1268
    %v1273 = vsel %vm1239, %v1269, 0.0
    %v1274 = vsel %vm1239, %v1270, 0.0
    %v1275 = vadd.f32 %v1273, %v1274
    %v1276 = vrot.slane %v1275, 4
    %v1277 = vadd.f32 %v1275, %v1276
    %v1278 = vrot.slane %v1277, 2
    %v1279 = vadd.f32 %v1277, %v1278
    %v1280 = vrot.slane %v1279, 1
    %v1281 = vadd.f32 %v1279, %v1280
    %v1282 = vsel %vm1239, %v1271, 0.0
    %v1283 = vsel %vm1239, %v1272, 0.0
    %v1284 = vadd.f32 %v1282, %v1283
    %v1285 = vrot.slane %v1284, 4
    %v1286 = vadd.f32 %v1284, %v1285
    %v1287 = vrot.slane %v1286, 2
    %v1288 = vadd.f32 %v1286, %v1287
    %v1289 = vrot.slane %v1288, 1
    %v1290 = vadd.f32 %v1288, %v1289
    %v1291 = vmul.f32 %v1281, %v915
    %v1292 = vmul.f32 %v1290, %v915
    %v1293 = vsel %vm1239, %v1291, 0.0
    %v1294 = vsel %vm1239, %v1292, 0.0
    %v1295 = vadd.f32 %v1293, %v1294
    %v1296 = vmul.f32 %v1295, %v1263
    %v1297 = vadd.f32 %v1296, 1e-05
    %v1298 = vrsqrt.pop %v1297
    %v1299 = vmul.f32 %v1265, %v1298
    %v1300 = vmul.f32 %v1266, %v1298
    %v1301 = vmul.f32 %v1267, %v1298
    %v1302 = vmul.f32 %v1268, %v1298
    %v1303 = vlaneseq
    %v1304 = vshrl.u32 %v1303, 7
    %v1305 = vsub.s32 3, %v1304
    %v1306 = vrot.slane %v38, %v1305
    %v1307 = vmul.f32 %v1299, %v1306
    %v1308 = vmul.f32 %v1300, %v1306
    %v1309 = vmul.f32 %v1301, %v1306
    %v1310 = vmul.f32 %v1302, %v1306
    %v1311 = vlaneseq
    %v1312 = vshrl.u32 %v1311, 7
    %v1313 = vsub.s32 4, %v1312
    %v1314 = vrot.slane %v38, %v1313
    %v1315 = vadd.f32 %v1307, %v1314
    %v1316 = vadd.f32 %v1308, %v1314
    %v1317 = vadd.f32 %v1309, %v1314
    %v1318 = vadd.f32 %v1310, %v1314
    %v1319 = vmax.f32 %v1315, 0.0
    %v1320 = vmax.f32 %v1316, 0.0
    %v1321 = vmax.f32 %v1317, 0.0
    %v1322 = vmax.f32 %v1318, 0.0
    %vm1323 = vcmask 123904
    %1324 = vst.msk [vmem:[#allocation3] sm:$0x3] %vm1323, 0.0
    %1325 = vst.msk [vmem:[#allocation3 + $0x10] sm:$0x3] %vm1323, 0.0
    %1326 = vst.msk [vmem:[#allocation3 + $0x2] sm:$0xff] %vm1239, %v1319
    %vm1327 = vcmask 128000
    %1328 = vst.msk [vmem:[#allocation3 + $0xa] sm:$0x3f] %vm1327, %v1320
    %1329 = vst.msk [vmem:[#allocation3 + $0x12] sm:$0xff] %vm1239, %v1321
    %1330 = vst.msk [vmem:[#allocation3 + $0x1a] sm:$0x3f] %vm1327, %v1322
    %1335 = vrot.lane.b32.xlu0 %v1319, 16
    %v1336 = vpop.permute.xlu0 %1335
    %1337 = vrot.lane.b32.xlu0 %v1320, 16
    %v1338 = vpop.permute.xlu0 %1337
    %1339 = vrot.lane.b32.xlu0 %v1321, 16
    %v1340 = vpop.permute.xlu0 %1339
    %1341 = vrot.lane.b32.xlu0 %v1322, 16
    %v1342 = vpop.permute.xlu0 %1341
    %vm1347 = vcmask 261248
    %1348 = vst.msk [vmem:[#allocation3] sm:$0xff] %vm1347, %v1336
    %1349 = vst.msk [vmem:[#allocation3 + $0x8] sm:$0xff] %vm1347, %v1338
    %1350 = vst.msk [vmem:[#allocation3 + $0x10] sm:$0xff] %vm1347, %v1340
    %1351 = vst.msk [vmem:[#allocation3 + $0x18] sm:$0xff] %vm1347, %v1342
    %1352 = vrot.lane.b32.xlu0 %v1319, 32
    %v1353 = vpop.permute.xlu0 %1352
    %1354 = vrot.lane.b32.xlu0 %v1320, 32
    %v1355 = vpop.permute.xlu0 %1354
    %1356 = vrot.lane.b32.xlu0 %v1321, 32
    %v1357 = vpop.permute.xlu0 %1356
    %1358 = vrot.lane.b32.xlu0 %v1322, 32
    %v1359 = vpop.permute.xlu0 %1358
    %vm1364 = vcmask 392450
    %1365 = vst.msk [vmem:[#allocation3 - $0x2] sm:$0xfc] %vm1364, %v1353
    %vm1366 = vcmask 392448
    %1367 = vst.msk [vmem:[#allocation3 + $0x6] sm:$0xff] %vm1366, %v1355
    %1368 = vst.msk [vmem:[#allocation3 + $0xe] sm:$0xfc] %vm1364, %v1357
    %1369 = vst.msk [vmem:[#allocation3 + $0x16] sm:$0xff] %vm1366, %v1359
    %vm1370 = vcmask 386304
    %1371 = vst.msk [vmem:[#allocation3 + $0xe] sm:$0x3] %vm1370, 0.0
    %1372 = vst.msk [vmem:[#allocation3 + $0x1e] sm:$0x3] %vm1370, 0.0
    %v1373 = vld [vmem:[#allocation3] sm:$0xff]
    %v1374 = vld [vmem:[#allocation3 + $0x8] sm:$0xff]
    %v1375 = vld [vmem:[#allocation3 + $0x10] sm:$0xff]
    %v1376 = vld [vmem:[#allocation3 + $0x18] sm:$0xff]
    %v1377 = vld [vmem:[%s7] sm:$0xff]
    %v1378 = vld [vmem:[%s7 + $0x8] sm:$0xff]
    %v1379 = vld [vmem:[%s7 + $0x10] sm:$0xff]
    %v1380 = vld [vmem:[%s7 + $0x18] sm:$0xff]
    %v1381 = vld [vmem:[%s7 + $0x20] sm:$0xff]
    %v1382 = vld [vmem:[%s7 + $0x28] sm:$0xff]
    %vm1383 = vcmask 392192
    %v1385 = vsel %vm1383, %v1373, 0
    %v1388 = vsel %vm1383, %v1374, 0
    %v1391 = vsel %vm1383, %v1375, 0
    %v1394 = vsel %vm1383, %v1376, 0
    %1396 = vmatprep.subr.mxu0 0.0
    %1397 = vmatpush1.msra.mxu0 0.0
    %1398 = vmatprep.subr.mxu0 0.0
    %1399 = vmatpush1.msra.mxu0 0.0
    %1400 = vmatprep.subr.mxu0 0.0
    %1401 = vmatpush1.msra.mxu0 0.0
    %1402 = vmatprep.subr.mxu0 0.0
    %1403 = vmatpush1.msra.mxu0 0.0
    %1404 = vmatprep.subr.mxu0 0.0
    %1405 = vmatpush1.msra.mxu0 0.0
    %1406 = vmatprep.subr.mxu0 0.0
    %1407 = vmatpush1.msra.mxu0 0.0
    %1408 = vmatprep.subr.mxu0 0.0
    %1409 = vmatpush1.msra.mxu0 0.0
    %1410 = vmatprep.subr.mxu0 0.0
    %1411 = vmatpush1.msra.mxu0 0.0
    %1412 = vmatprep.subr.mxu0 0.0
    %1413 = vmatpush1.msra.mxu0 0.0
    %1414 = vmatprep.subr.mxu0 0.0
    %1415 = vmatpush1.msra.mxu0 0.0
    %1416 = vmatprep.subr.mxu0 0.0
    %1417 = vmatpush1.msra.mxu0 %v1382
    %1418 = vmatprep.subr.mxu0 0.0
    %1419 = vmatpush1.msra.mxu0 %v1381
    %1420 = vmatprep.subr.mxu0 0.0
    %1421 = vmatpush1.msra.mxu0 %v1380
    %1422 = vmatprep.subr.mxu0 0.0
    %1423 = vmatpush1.msra.mxu0 %v1379
    %1424 = vmatprep.subr.mxu0 0.0
    %1425 = vmatpush1.msra.mxu0 %v1378
    %1426 = vmatprep.subr.mxu0 0.0
    %1427 = vmatpush1.msra.mxu0 %v1377
    %1428 = vmatprep.subr.mxu0 0.0
    %1429 = vmatpush2.msra.mxu0 0.0
    %1430 = vmatprep.subr.mxu0 0.0
    %1431 = vmatpush2.msra.mxu0 0.0
    %1432 = vmatprep.subr.mxu0 0.0
    %1433 = vmatpush2.msra.mxu0 0.0
    %1434 = vmatprep.subr.mxu0 0.0
    %1435 = vmatpush2.msra.mxu0 0.0
    %1436 = vmatprep.subr.mxu0 0.0
    %1437 = vmatpush2.msra.mxu0 0.0
    %1438 = vmatprep.subr.mxu0 0.0
    %1439 = vmatpush2.msra.mxu0 0.0
    %1440 = vmatprep.subr.mxu0 0.0
    %1441 = vmatpush2.msra.mxu0 0.0
    %1442 = vmatprep.subr.mxu0 0.0
    %1443 = vmatpush2.msra.mxu0 0.0
    %1444 = vmatprep.subr.mxu0 0.0
    %1445 = vmatpush2.msra.mxu0 0.0
    %1446 = vmatprep.subr.mxu0 0.0
    %1447 = vmatpush2.msra.mxu0 0.0
    %1448 = vmatprep.subr.mxu0 0.0
    %1449 = vmatpush2.msra.mxu0 0.0
    %1450 = vmatprep.subr.mxu0 0.0
    %1451 = vmatpush2.msra.mxu0 0.0
    %1452 = vmatprep.subr.mxu0 0.0
    %1453 = vmatpush2.msra.mxu0 0.0
    %1454 = vmatprep.subr.mxu0 0.0
    %1455 = vmatpush2.msra.mxu0 0.0
    %1456 = vmatprep.subr.mxu0 0.0
    %1457 = vmatpush2.msra.mxu0 0.0
    %1458 = vmatprep.subr.mxu0 0.0
    %1459 = vmatpush2.msra.mxu0 0.0
    %1460 = vmatprep.mubr.f32.mxu0 0.0
    %1461 = vmatmul.mubr.f32.gmra.mxu0 %v1385
    %v1462 = vpop.f32.mrf.mxu0
    %v1463 = vadd.f32 0.0, %v1462
    %v1464 = vpop.f32.mrf.mxu0
    %1465 = vmatprep.mubr.f32.mxu0 0.0
    %1466 = vmatmul.mubr.f32.gmra.mxu0 %v1388
    %v1467 = vpop.f32.mrf.mxu0
    %v1468 = vadd.f32 0.0, %v1467
    %v1469 = vpop.f32.mrf.mxu0
    %1470 = vmatprep.mubr.f32.mxu0 0.0
    %1471 = vmatmul.mubr.f32.gmra.mxu0 %v1391
    %v1472 = vpop.f32.mrf.mxu0
    %v1473 = vadd.f32 0.0, %v1472
    %v1474 = vpop.f32.mrf.mxu0
    %1475 = vmatprep.mubr.f32.mxu0 0.0
    %1476 = vmatmul.mubr.f32.gmra.mxu0 %v1394
    %v1477 = vpop.f32.mrf.mxu0
    %v1478 = vadd.f32 0.0, %v1477
    %v1479 = vpop.f32.mrf.mxu0
    %1480 = vdwg.mxu0
    %v1481 = vlaneseq
    %v1482 = vshrl.u32 %v1481, 7
    %v1483 = vsub.s32 5, %v1482
    %v1484 = vrot.slane %v38, %v1483
    %v1485 = vadd.f32 %v1463, %v1484
    %v1486 = vadd.f32 %v1468, %v1484
    %v1487 = vadd.f32 %v1473, %v1484
    %v1488 = vadd.f32 %v1478, %v1484
    %v1489 = vsel %vm57, %v1485, 0.0
    %v1490 = vsel %vm57, %v1486, 0.0
    %v1491 = vadd.f32 %v1489, %v1490
    %v1492 = vrot.slane %v1491, 4
    %v1493 = vadd.f32 %v1491, %v1492
    %v1494 = vrot.slane %v1493, 2
    %v1495 = vadd.f32 %v1493, %v1494
    %v1496 = vrot.slane %v1495, 1
    %v1497 = vadd.f32 %v1495, %v1496
    %v1498 = vsel %vm57, %v1487, 0.0
    %v1499 = vsel %vm57, %v1488, 0.0
    %v1500 = vadd.f32 %v1498, %v1499
    %v1501 = vrot.slane %v1500, 4
    %v1502 = vadd.f32 %v1500, %v1501
    %v1503 = vrot.slane %v1502, 2
    %v1504 = vadd.f32 %v1502, %v1503
    %v1505 = vrot.slane %v1504, 1
    %v1506 = vadd.f32 %v1504, %v1505
    %v1507 = vmul.f32 %v1497, %v915
    %v1508 = vmul.f32 %v1506, %v915
    %v1509 = vsel %vm57, %v1507, 0.0
    %v1510 = vsel %vm57, %v1508, 0.0
    %v1511 = vadd.f32 %v1509, %v1510
    %v1512 = vmul.f32 %v1511, %v1263
    %v1513 = vsub.f32 %v1485, %v1512
    %v1514 = vsub.f32 %v1486, %v1512
    %v1515 = vsub.f32 %v1487, %v1512
    %v1516 = vsub.f32 %v1488, %v1512
    %v1517 = vmul.f32 %v1513, %v1513
    %v1518 = vmul.f32 %v1514, %v1514
    %v1519 = vmul.f32 %v1515, %v1515
    %v1520 = vmul.f32 %v1516, %v1516
    %v1521 = vsel %vm57, %v1517, 0.0
    %v1522 = vsel %vm57, %v1518, 0.0
    %v1523 = vadd.f32 %v1521, %v1522
    %v1524 = vrot.slane %v1523, 4
    %v1525 = vadd.f32 %v1523, %v1524
    %v1526 = vrot.slane %v1525, 2
    %v1527 = vadd.f32 %v1525, %v1526
    %v1528 = vrot.slane %v1527, 1
    %v1529 = vadd.f32 %v1527, %v1528
    %v1530 = vsel %vm57, %v1519, 0.0
    %v1531 = vsel %vm57, %v1520, 0.0
    %v1532 = vadd.f32 %v1530, %v1531
    %v1533 = vrot.slane %v1532, 4
    %v1534 = vadd.f32 %v1532, %v1533
    %v1535 = vrot.slane %v1534, 2
    %v1536 = vadd.f32 %v1534, %v1535
    %v1537 = vrot.slane %v1536, 1
    %v1538 = vadd.f32 %v1536, %v1537
    %v1539 = vmul.f32 %v1529, %v915
    %v1540 = vmul.f32 %v1538, %v915
    %v1541 = vsel %vm57, %v1539, 0.0
    %v1542 = vsel %vm57, %v1540, 0.0
    %v1543 = vadd.f32 %v1541, %v1542
    %v1544 = vmul.f32 %v1543, %v1263
    %v1545 = vadd.f32 %v1544, 1e-05
    %v1546 = vrsqrt.pop %v1545
    %v1547 = vmul.f32 %v1513, %v1546
    %v1548 = vmul.f32 %v1514, %v1546
    %v1549 = vmul.f32 %v1515, %v1546
    %v1550 = vmul.f32 %v1516, %v1546
    %v1551 = vlaneseq
    %v1552 = vshrl.u32 %v1551, 7
    %v1553 = vsub.s32 6, %v1552
    %v1554 = vrot.slane %v38, %v1553
    %v1555 = vmul.f32 %v1547, %v1554
    %v1556 = vmul.f32 %v1548, %v1554
    %v1557 = vmul.f32 %v1549, %v1554
    %v1558 = vmul.f32 %v1550, %v1554
    %v1559 = vlaneseq
    %v1560 = vshrl.u32 %v1559, 7
    %v1561 = vsub.s32 7, %v1560
    %v1562 = vrot.slane %v38, %v1561
    %v1563 = vadd.f32 %v1555, %v1562
    %v1564 = vadd.f32 %v1556, %v1562
    %v1565 = vadd.f32 %v1557, %v1562
    %v1566 = vadd.f32 %v1558, %v1562
    %v1567 = vadd.f32 %v1563, %v34
    %v1568 = vadd.f32 %v1564, %v35
    %v1569 = vadd.f32 %v1565, %v36
    %v1570 = vadd.f32 %v1566, %v37
    %1571 = vst.msk [vmem:[#allocation4] sm:$0xff] %vm57, %v1567
    %1572 = vst.msk [vmem:[#allocation4 + $0x8] sm:$0xff] %vm57, %v1568
    %1573 = vst.msk [vmem:[#allocation4 + $0x10] sm:$0xff] %vm57, %v1569
    %1574 = vst.msk [vmem:[#allocation4 + $0x18] sm:$0xff] %vm57, %v1570
    // Predicated region
    $region38: #{improved_res2dilated_conv1d.1} parent=1 // pred_check
      _
    $region39: #{improved_res2dilated_conv1d.1} parent=1 // pred_check_branch
      %1576 = sbr.rel (0) target = $region41
    $region40: #{improved_res2dilated_conv1d.1} parent=1 // pred_region
      %s1578 = ssub.s32 512, 512
      %1579 = vsyncadd [#allocation5], %s1578
      %s1580 = sshll.u32 [#allocation4], 4
      %s1581 = int_to_ptr.vmem [resolvable:$true] %s1580
      %1586 = dma.vmem_to_hbm [thread:$0]  %s1581, 512, %s9, [#allocation5], 128, 128, 8
    $region41: #{improved_res2dilated_conv1d.1} parent=1 // pred_fallthru
      _
    // Predicated region
    $region42: #{improved_res2dilated_conv1d.1} parent=1 // pred_check
      _
    $region43: #{improved_res2dilated_conv1d.1} parent=1 // pred_check_branch
      %1588 = sbr.rel (0) target = $region45
    $region44: #{improved_res2dilated_conv1d.1} parent=1 // pred_region
      %1589 = dma.done [#allocation5], 512
    $region45: #{improved_res2dilated_conv1d.1} parent=1 // pred_fallthru
      _
    %1590 = vsyncpa [#allocation5], 1

</llo_original>
